<compile_context>
chip_gen: v7x
topology: tpu7x:2x2x1
jax: 0.10.0
libtpu: 0.0.40
codegen_flags: <defaults>
</compile_context>

<pallas_src>
import jax
import jax.numpy as jnp
from jax.experimental import pallas as pl
from jax.experimental.pallas import tpu as pltpu


# ----------------------------------------------------------------------------
# Kernel: one batch element per grid step.
# ----------------------------------------------------------------------------
def essay_scoring_kernel(
    essay_ref, prompt_ref,                       # [S, H] bf16 each
    wq1_ref, bq1_ref, wkv1_ref, bkv1_ref,        # self-attn (essay)
    wq2_ref, bq2_ref, wkv2_ref, bkv2_ref,        # cross-attn (prompt)
    wr_resp_ref, wr_prompt_ref, br_ref,          # regression head (split)
    out_ref,                                     # [1, 4] f32
):
    H = essay_ref.shape[-1]
    inv_scale = jax.lax.rsqrt(jnp.float32(H))    # 1 / sqrt(hidden_size)

    essay = essay_ref[...]                       # [S, H] bf16
    prompt = prompt_ref[...]                     # [S, H] bf16

    # ---------------- ResponseAttention (self-attention over essay) ---------
    # Fused K/V projection: one [S,H] @ [H,2H] MXU matmul, f32 accumulation.
    kv1 = jnp.dot(essay, wkv1_ref[...],
                  preferred_element_type=jnp.float32) + bkv1_ref[...]       # [S, 2H]
    k1 = kv1[:, :H]                                                         # [S, H]
    v1 = kv1[:, H:]                                                         # [S, H]

    # Only query row 0 is ever used downstream -> compute just that row.
    q1 = jnp.dot(essay[0:1, :], wq1_ref[...],
                 preferred_element_type=jnp.float32) + bq1_ref[...]         # [1, H]

    s1 = jnp.einsum('qd,kd->qk', q1, k1,
                    preferred_element_type=jnp.float32) * inv_scale         # [1, S]
    s1 = s1 - jnp.max(s1, axis=-1, keepdims=True)
    e1 = jnp.exp(s1)
    w1 = e1 * pl.reciprocal(jnp.sum(e1, axis=-1, keepdims=True), approx=True)
    response_vec = jnp.dot(w1, v1, preferred_element_type=jnp.float32)      # [1, H]

    # -------- ResponsePromptAttention (query=response_vec, kv=prompt) -------
    z = jnp.dot(response_vec.astype(jnp.bfloat16), wq2_ref[...],
                preferred_element_type=jnp.float32) + bq2_ref[...]          # [1, H]

    kv2 = jnp.dot(prompt, wkv2_ref[...],
                  preferred_element_type=jnp.float32) + bkv2_ref[...]       # [S, 2H]
    k2 = kv2[:, :H]
    v2 = kv2[:, H:]

    s2 = jnp.einsum('qd,kd->qk', z, k2,
                    preferred_element_type=jnp.float32) * inv_scale         # [1, S]
    s2 = s2 - jnp.max(s2, axis=-1, keepdims=True)
    e2 = jnp.exp(s2)
    w2 = e2 * pl.reciprocal(jnp.sum(e2, axis=-1, keepdims=True), approx=True)
    prompt_vec = jnp.dot(w2, v2, preferred_element_type=jnp.float32)        # [1, H]

    # ----- Linear(2H -> 4) on concat([response, prompt]) without concat -----
    score = (jnp.dot(response_vec, wr_resp_ref[...],
                     preferred_element_type=jnp.float32)
             + jnp.dot(prompt_vec, wr_prompt_ref[...],
                       preferred_element_type=jnp.float32)
             + br_ref[...])                                                 # [1, 4]
    out_ref[...] = score.astype(out_ref.dtype)


# ----------------------------------------------------------------------------
# Parameter construction (PyTorch [out, in] convention) + one-time packing.
# ----------------------------------------------------------------------------
def init_params(key, hidden_size, num_outputs=4, vocab=64):
    ks = jax.random.split(key, 8)

    def lin(k, out_dim, in_dim):
        kw, kb = jax.random.split(k)
        w = jax.random.normal(kw, (out_dim, in_dim), jnp.float32) * 0.02
        b = jax.random.normal(kb, (out_dim,), jnp.float32) * 0.02
        return w, b

    p = {}
    p['wq1'], p['bq1'] = lin(ks[0], hidden_size, hidden_size)
    p['wk1'], p['bk1'] = lin(ks[1], hidden_size, hidden_size)
    p['wv1'], p['bv1'] = lin(ks[2], hidden_size, hidden_size)
    p['wq2'], p['bq2'] = lin(ks[3], hidden_size, hidden_size)
    p['wk2'], p['bk2'] = lin(ks[4], hidden_size, hidden_size)
    p['wv2'], p['bv2'] = lin(ks[5], hidden_size, hidden_size)
    p['wr'],  p['br']  = lin(ks[6], num_outputs, 2 * hidden_size)
    # backbone substitute: deterministic token embedding table
    # TODO(synk): ElectraModel.from_pretrained has no Pallas equivalent.
    p['embed'] = jax.random.normal(ks[7], (vocab, hidden_size), jnp.float32) * 0.02
    return p


def pack_params(params):
    """One-time re-layout: [out,in] -> [in,out], K/V fused, head split, bf16."""
    H = params['wq1'].shape[0]

    def t(name):
        return jnp.asarray(params[name]).T  # -> [in, out]

    wr_t = t('wr')                                             # [2H, 4]
    packed = {
        'wq1':  t('wq1').astype(jnp.bfloat16),
        'bq1':  params['bq1'][None, :].astype(jnp.float32),
        'wkv1': jnp.concatenate([t('wk1'), t('wv1')], axis=1).astype(jnp.bfloat16),
        'bkv1': jnp.concatenate([params['bk1'], params['bv1']])[None, :].astype(jnp.float32),
        'wq2':  t('wq2').astype(jnp.bfloat16),
        'bq2':  params['bq2'][None, :].astype(jnp.float32),
        'wkv2': jnp.concatenate([t('wk2'), t('wv2')], axis=1).astype(jnp.bfloat16),
        'bkv2': jnp.concatenate([params['bk2'], params['bv2']])[None, :].astype(jnp.float32),
        # head is tiny (2H x 4): keep f32, split so no in-kernel concat needed
        'wr_resp':   wr_t[:H, :].astype(jnp.float32),          # response half
        'wr_prompt': wr_t[H:, :].astype(jnp.float32),          # prompt half
        'br':   params['br'][None, :].astype(jnp.float32),
        'embed': params['embed'],
    }
    return packed


# ----------------------------------------------------------------------------
# Forward wrapper.
# ----------------------------------------------------------------------------
def essay_scoring_forward(packed,
                          essay_input_ids, essay_attention_mask, essay_token_type_ids,
                          topic_input_ids, topic_attention_mask, topic_token_type_ids):
    H = packed['embed'].shape[-1]
    B, S = essay_input_ids.shape
    # Block alignment: S on sublanes, H on lanes.
    assert S % 8 == 0 and H % 128 == 0, (S, H)

    # ---- backbone substitute (plain-JAX glue, outside the kernel) ----------
    # TODO(synk): ElectraModel backbone replaced by deterministic embedding lookup.
    essay_emb = (packed['embed'][essay_input_ids]
                 * essay_attention_mask[..., None]).astype(jnp.bfloat16)   # [B,S,H]
    prompt_emb = (packed['embed'][topic_input_ids]
                  * topic_attention_mask[..., None]).astype(jnp.bfloat16)  # [B,S,H]
    del essay_token_type_ids, topic_token_type_ids  # unused by substitute backbone

    args = (
        essay_emb, prompt_emb,
        packed['wq1'], packed['bq1'], packed['wkv1'], packed['bkv1'],
        packed['wq2'], packed['bq2'], packed['wkv2'], packed['bkv2'],
        packed['wr_resp'], packed['wr_prompt'], packed['br'],
    )

    def const_spec(shape):
        # Weights / biases: full block, same block index every step -> stays
        # VMEM-resident across the whole grid (no per-step re-DMA).
        return pl.BlockSpec(shape, lambda b, _n=len(shape): (0,) * _n)

    in_specs = [
        pl.BlockSpec((None, S, H), lambda b: (b, 0, 0)),     # essay  -> [S, H]
        pl.BlockSpec((None, S, H), lambda b: (b, 0, 0)),     # prompt -> [S, H]
        const_spec((H, H)),      const_spec((1, H)),          # wq1, bq1
        const_spec((H, 2 * H)),  const_spec((1, 2 * H)),      # wkv1, bkv1
        const_spec((H, H)),      const_spec((1, H)),          # wq2, bq2
        const_spec((H, 2 * H)),  const_spec((1, 2 * H)),      # wkv2, bkv2
        const_spec((H, 4)),      const_spec((H, 4)),          # wr_resp, wr_prompt
        const_spec((1, 4)),                                   # br
    ]

    out = pl.pallas_call(
        essay_scoring_kernel,
        grid=(B,),
        out_shape=jax.ShapeDtypeStruct((B, 1, 4), jnp.float32),
        in_specs=in_specs,
        out_specs=pl.BlockSpec((None, 1, 4), lambda b: (b, 0, 0)),
        compiler_params=pltpu.CompilerParams(
            dimension_semantics=("parallel",),
            vmem_limit_bytes=32 * 1024 * 1024,
        ),
    )(*args)
    return out[:, 0, :]                                       # [B, 4]


# ----------------------------------------------------------------------------
# Pure-JAX reference (f32 everywhere) mirroring the PyTorch graph.
# ----------------------------------------------------------------------------
def reference_forward(params, essay_ids, essay_mask, topic_ids, topic_mask):
    H = params['embed'].shape[-1]
    essay = params['embed'][essay_ids] * essay_mask[..., None]    # [B,S,H]
    prompt = params['embed'][topic_ids] * topic_mask[..., None]
    scale = jnp.sqrt(jnp.float32(H))

    def lin(x, w, b):  # w in PyTorch [out, in] convention
        return x @ w.T + b

    # ResponseAttention(essay) -> take query row 0
    q = lin(essay, params['wq1'], params['bq1'])
    k = lin(essay, params['wk1'], params['bk1'])
    v = lin(essay, params['wv1'], params['bv1'])
    s = jnp.einsum('bqd,bkd->bqk', q, k) / scale
    w_ = jax.nn.softmax(s, axis=-1)
    resp = jnp.einsum('bqk,bkd->bqd', w_, v)[:, 0, :]             # [B, H]

    # ResponsePromptAttention(resp, prompt) -> take query row 0
    z = lin(resp[:, None, :], params['wq2'], params['bq2'])       # [B,1,H]
    k2 = lin(prompt, params['wk2'], params['bk2'])
    v2 = lin(prompt, params['wv2'], params['bv2'])
    s2 = jnp.einsum('bqd,bkd->bqk', z, k2) / scale
    w2_ = jax.nn.softmax(s2, axis=-1)
    pvec = jnp.einsum('bqk,bkd->bqd', w2_, v2)[:, 0, :]           # [B, H]

    combined = jnp.concatenate([resp, pvec], axis=-1)             # [B, 2H]
    return lin(combined, params['wr'], params['br'])              # [B, 4]


if __name__ == "__main__":
    B, S, H, VOCAB = 2, 8, 128, 64

    key = jax.random.PRNGKey(0)
    k_param, k_essay, k_topic = jax.random.split(key, 3)

    params = init_params(k_param, H, vocab=VOCAB)
    packed = pack_params(params)   # one-time weight re-layout / fusion

    essay_ids = jax.random.randint(k_essay, (B, S), 0, VOCAB, dtype=jnp.int32)
    topic_ids = jax.random.randint(k_topic, (B, S), 0, VOCAB, dtype=jnp.int32)
    essay_mask = jnp.ones((B, S), jnp.float32)
    topic_mask = jnp.ones((B, S), jnp.float32)
    essay_tt = jnp.zeros((B, S), jnp.int32)
    topic_tt = jnp.zeros((B, S), jnp.int32)

    score = essay_scoring_forward(packed,
                                  essay_ids, essay_mask, essay_tt,
                                  topic_ids, topic_mask, topic_tt)
    score = jax.block_until_ready(score)
    assert score.shape == (B, 4), score.shape
    assert jnp.all(jnp.isfinite(score))

    # Correctness check against the pure-JAX f32 reference (loose tolerance
    # to absorb bf16 matmul inputs + approx reciprocal in softmax).
    ref = jax.block_until_ready(
        reference_forward(params, essay_ids, essay_mask, topic_ids, topic_mask))
    assert jnp.allclose(score, ref, rtol=5e-2, atol=5e-2), (score, ref)

    print("KERNEL_OK")
</pallas_src>

<mosaic_0001>
module attributes {stable_mosaic.version = 11 : i64} {
  func.func @essay_scoring_kernel(%arg0: i32, %arg1: memref<1x8x128xbf16, #tpu.memory_space<vmem>>, %arg2: memref<1x8x128xbf16, #tpu.memory_space<vmem>>, %arg3: memref<128x128xbf16, #tpu.memory_space<vmem>>, %arg4: memref<1x128xf32, #tpu.memory_space<vmem>>, %arg5: memref<128x256xbf16, #tpu.memory_space<vmem>>, %arg6: memref<1x256xf32, #tpu.memory_space<vmem>>, %arg7: memref<128x128xbf16, #tpu.memory_space<vmem>>, %arg8: memref<1x128xf32, #tpu.memory_space<vmem>>, %arg9: memref<128x256xbf16, #tpu.memory_space<vmem>>, %arg10: memref<1x256xf32, #tpu.memory_space<vmem>>, %arg11: memref<128x4xf32, #tpu.memory_space<vmem>>, %arg12: memref<128x4xf32, #tpu.memory_space<vmem>>, %arg13: memref<1x4xf32, #tpu.memory_space<vmem>>, %arg14: memref<1x1x4xf32, #tpu.memory_space<vmem>>) attributes {dimension_semantics = [#tpu.dimension_semantics<parallel>], iteration_bounds = array<i64: 2>, scalar_prefetch = 0 : i64, scratch_operands = 0 : i64, tpu.core_type = #tpu.core_type<tc>, window_params = [{transform_indices = @transform_0, window_bounds = array<i64: 1, 8, 128>}, {transform_indices = @transform_1, window_bounds = array<i64: 1, 8, 128>}, {pipeline_mode = #tpu.pipeline_mode<synchronous>, transform_indices = @transform_2, window_bounds = array<i64: 128, 128>}, {pipeline_mode = #tpu.pipeline_mode<synchronous>, transform_indices = @transform_3, window_bounds = array<i64: 1, 128>}, {pipeline_mode = #tpu.pipeline_mode<synchronous>, transform_indices = @transform_4, window_bounds = array<i64: 128, 256>}, {pipeline_mode = #tpu.pipeline_mode<synchronous>, transform_indices = @transform_5, window_bounds = array<i64: 1, 256>}, {pipeline_mode = #tpu.pipeline_mode<synchronous>, transform_indices = @transform_6, window_bounds = array<i64: 128, 128>}, {pipeline_mode = #tpu.pipeline_mode<synchronous>, transform_indices = @transform_7, window_bounds = array<i64: 1, 128>}, {pipeline_mode = #tpu.pipeline_mode<synchronous>, transform_indices = @transform_8, window_bounds = array<i64: 128, 256>}, {pipeline_mode = #tpu.pipeline_mode<synchronous>, transform_indices = @transform_9, window_bounds = array<i64: 1, 256>}, {pipeline_mode = #tpu.pipeline_mode<synchronous>, transform_indices = @transform_10, window_bounds = array<i64: 128, 4>}, {pipeline_mode = #tpu.pipeline_mode<synchronous>, transform_indices = @transform_11, window_bounds = array<i64: 128, 4>}, {pipeline_mode = #tpu.pipeline_mode<synchronous>, transform_indices = @transform_12, window_bounds = array<i64: 1, 4>}, {transform_indices = @transform_13, window_bounds = array<i64: 1, 1, 4>}]} {
    %cst = arith.constant 1.280000e+02 : f32
    %0 = math.rsqrt %cst : f32
    %c0 = arith.constant 0 : index
    %c0_0 = arith.constant 0 : index
    %c0_1 = arith.constant 0 : index
    %1 = vector.load %arg1[%c0, %c0_0, %c0_1] : memref<1x8x128xbf16, #tpu.memory_space<vmem>>, vector<1x8x128xbf16>
    %2 = vector.shape_cast %1 : vector<1x8x128xbf16> to vector<8x128xbf16>
    %c0_2 = arith.constant 0 : index
    %c0_3 = arith.constant 0 : index
    %c0_4 = arith.constant 0 : index
    %3 = vector.load %arg2[%c0_2, %c0_3, %c0_4] : memref<1x8x128xbf16, #tpu.memory_space<vmem>>, vector<1x8x128xbf16>
    %4 = vector.shape_cast %3 : vector<1x8x128xbf16> to vector<8x128xbf16>
    %c0_5 = arith.constant 0 : index
    %c0_6 = arith.constant 0 : index
    %5 = vector.load %arg5[%c0_5, %c0_6] : memref<128x256xbf16, #tpu.memory_space<vmem>>, vector<128x256xbf16>
    %cst_7 = arith.constant dense<0.000000e+00> : vector<8x256xf32>
    %6 = tpu.matmul %2, %5, %cst_7 {dimension_numbers = #tpu.dot_dimension_numbers<[1], [0], [0], [1], [0, 0, 1, 1], [], []>} : vector<8x128xbf16>, vector<128x256xbf16>, vector<8x256xf32> -> vector<8x256xf32>
    %c0_8 = arith.constant 0 : index
    %c0_9 = arith.constant 0 : index
    %7 = vector.load %arg6[%c0_8, %c0_9] : memref<1x256xf32, #tpu.memory_space<vmem>>, vector<1x256xf32>
    %8 = vector.broadcast %7 : vector<1x256xf32> to vector<8x256xf32>
    %9 = arith.addf %6, %8 : vector<8x256xf32>
    %10 = vector.extract_strided_slice %9 {offsets = [0, 0], sizes = [8, 128], strides = [1, 1]} : vector<8x256xf32> to vector<8x128xf32>
    %11 = vector.extract_strided_slice %9 {offsets = [0, 128], sizes = [8, 128], strides = [1, 1]} : vector<8x256xf32> to vector<8x128xf32>
    %12 = vector.extract_strided_slice %2 {offsets = [0, 0], sizes = [1, 128], strides = [1, 1]} : vector<8x128xbf16> to vector<1x128xbf16>
    %c0_10 = arith.constant 0 : index
    %c0_11 = arith.constant 0 : index
    %13 = vector.load %arg3[%c0_10, %c0_11] : memref<128x128xbf16, #tpu.memory_space<vmem>>, vector<128x128xbf16>
    %cst_12 = arith.constant dense<0.000000e+00> : vector<1x128xf32>
    %14 = tpu.matmul %12, %13, %cst_12 {dimension_numbers = #tpu.dot_dimension_numbers<[1], [0], [0], [1], [0, 0, 1, 1], [], []>} : vector<1x128xbf16>, vector<128x128xbf16>, vector<1x128xf32> -> vector<1x128xf32>
    %c0_13 = arith.constant 0 : index
    %c0_14 = arith.constant 0 : index
    %15 = vector.load %arg4[%c0_13, %c0_14] : memref<1x128xf32, #tpu.memory_space<vmem>>, vector<1x128xf32>
    %16 = arith.addf %14, %15 : vector<1x128xf32>
    "tpu.trace_start"() <{level = 10 : i32, message = "qd,kd->qk"}> : () -> ()
    %cst_15 = arith.constant dense<0.000000e+00> : vector<1x8xf32>
    %17 = tpu.matmul %16, %10, %cst_15 {dimension_numbers = #tpu.dot_dimension_numbers<[1], [1], [0], [0], [0, 0, 1, 0], [], []>} : vector<1x128xf32>, vector<8x128xf32>, vector<1x8xf32> -> vector<1x8xf32>
    "tpu.trace_stop"() : () -> ()
    %18 = vector.broadcast %0 : f32 to vector<1x8xf32>
    %19 = arith.mulf %17, %18 : vector<1x8xf32>
    %cst_16 = arith.constant dense<0xFF800000> : vector<1xf32>
    %20 = vector.multi_reduction <maximumf>, %19, %cst_16 [1] : vector<1x8xf32> to vector<1xf32>
    %21 = vector.shape_cast %20 : vector<1xf32> to vector<1x1xf32>
    %22 = vector.broadcast %21 : vector<1x1xf32> to vector<1x8xf32>
    %23 = arith.subf %19, %22 : vector<1x8xf32>
    %24 = math.exp %23 : vector<1x8xf32>
    %cst_17 = arith.constant dense<0.000000e+00> : vector<1xf32>
    %25 = vector.multi_reduction <add>, %24, %cst_17 [1] : vector<1x8xf32> to vector<1xf32>
    %26 = vector.shape_cast %25 : vector<1xf32> to vector<1x1xf32>
    %27 = tpu.reciprocal %26 {approx = true} : vector<1x1xf32> -> vector<1x1xf32>
    %28 = vector.broadcast %27 : vector<1x1xf32> to vector<1x8xf32>
    %29 = arith.mulf %24, %28 : vector<1x8xf32>
    %cst_18 = arith.constant dense<0.000000e+00> : vector<1x128xf32>
    %30 = tpu.matmul %29, %11, %cst_18 {dimension_numbers = #tpu.dot_dimension_numbers<[1], [0], [0], [1], [0, 0, 1, 1], [], []>} : vector<1x8xf32>, vector<8x128xf32>, vector<1x128xf32> -> vector<1x128xf32>
    %31 = arith.truncf %30 : vector<1x128xf32> to vector<1x128xbf16>
    %c0_19 = arith.constant 0 : index
    %c0_20 = arith.constant 0 : index
    %32 = vector.load %arg7[%c0_19, %c0_20] : memref<128x128xbf16, #tpu.memory_space<vmem>>, vector<128x128xbf16>
    %cst_21 = arith.constant dense<0.000000e+00> : vector<1x128xf32>
    %33 = tpu.matmul %31, %32, %cst_21 {dimension_numbers = #tpu.dot_dimension_numbers<[1], [0], [0], [1], [0, 0, 1, 1], [], []>} : vector<1x128xbf16>, vector<128x128xbf16>, vector<1x128xf32> -> vector<1x128xf32>
    %c0_22 = arith.constant 0 : index
    %c0_23 = arith.constant 0 : index
    %34 = vector.load %arg8[%c0_22, %c0_23] : memref<1x128xf32, #tpu.memory_space<vmem>>, vector<1x128xf32>
    %35 = arith.addf %33, %34 : vector<1x128xf32>
    %c0_24 = arith.constant 0 : index
    %c0_25 = arith.constant 0 : index
    %36 = vector.load %arg9[%c0_24, %c0_25] : memref<128x256xbf16, #tpu.memory_space<vmem>>, vector<128x256xbf16>
    %cst_26 = arith.constant dense<0.000000e+00> : vector<8x256xf32>
    %37 = tpu.matmul %4, %36, %cst_26 {dimension_numbers = #tpu.dot_dimension_numbers<[1], [0], [0], [1], [0, 0, 1, 1], [], []>} : vector<8x128xbf16>, vector<128x256xbf16>, vector<8x256xf32> -> vector<8x256xf32>
    %c0_27 = arith.constant 0 : index
    %c0_28 = arith.constant 0 : index
    %38 = vector.load %arg10[%c0_27, %c0_28] : memref<1x256xf32, #tpu.memory_space<vmem>>, vector<1x256xf32>
    %39 = vector.broadcast %38 : vector<1x256xf32> to vector<8x256xf32>
    %40 = arith.addf %37, %39 : vector<8x256xf32>
    %41 = vector.extract_strided_slice %40 {offsets = [0, 0], sizes = [8, 128], strides = [1, 1]} : vector<8x256xf32> to vector<8x128xf32>
    %42 = vector.extract_strided_slice %40 {offsets = [0, 128], sizes = [8, 128], strides = [1, 1]} : vector<8x256xf32> to vector<8x128xf32>
    "tpu.trace_start"() <{level = 10 : i32, message = "qd,kd->qk"}> : () -> ()
    %cst_29 = arith.constant dense<0.000000e+00> : vector<1x8xf32>
    %43 = tpu.matmul %35, %41, %cst_29 {dimension_numbers = #tpu.dot_dimension_numbers<[1], [1], [0], [0], [0, 0, 1, 0], [], []>} : vector<1x128xf32>, vector<8x128xf32>, vector<1x8xf32> -> vector<1x8xf32>
    "tpu.trace_stop"() : () -> ()
    %44 = vector.broadcast %0 : f32 to vector<1x8xf32>
    %45 = arith.mulf %43, %44 : vector<1x8xf32>
    %cst_30 = arith.constant dense<0xFF800000> : vector<1xf32>
    %46 = vector.multi_reduction <maximumf>, %45, %cst_30 [1] : vector<1x8xf32> to vector<1xf32>
    %47 = vector.shape_cast %46 : vector<1xf32> to vector<1x1xf32>
    %48 = vector.broadcast %47 : vector<1x1xf32> to vector<1x8xf32>
    %49 = arith.subf %45, %48 : vector<1x8xf32>
    %50 = math.exp %49 : vector<1x8xf32>
    %cst_31 = arith.constant dense<0.000000e+00> : vector<1xf32>
    %51 = vector.multi_reduction <add>, %50, %cst_31 [1] : vector<1x8xf32> to vector<1xf32>
    %52 = vector.shape_cast %51 : vector<1xf32> to vector<1x1xf32>
    %53 = tpu.reciprocal %52 {approx = true} : vector<1x1xf32> -> vector<1x1xf32>
    %54 = vector.broadcast %53 : vector<1x1xf32> to vector<1x8xf32>
    %55 = arith.mulf %50, %54 : vector<1x8xf32>
    %cst_32 = arith.constant dense<0.000000e+00> : vector<1x128xf32>
    %56 = tpu.matmul %55, %42, %cst_32 {dimension_numbers = #tpu.dot_dimension_numbers<[1], [0], [0], [1], [0, 0, 1, 1], [], []>} : vector<1x8xf32>, vector<8x128xf32>, vector<1x128xf32> -> vector<1x128xf32>
    %c0_33 = arith.constant 0 : index
    %c0_34 = arith.constant 0 : index
    %57 = vector.load %arg11[%c0_33, %c0_34] : memref<128x4xf32, #tpu.memory_space<vmem>>, vector<128x4xf32>
    %cst_35 = arith.constant dense<0.000000e+00> : vector<1x4xf32>
    %58 = tpu.matmul %30, %57, %cst_35 {dimension_numbers = #tpu.dot_dimension_numbers<[1], [0], [0], [1], [0, 0, 1, 1], [], []>} : vector<1x128xf32>, vector<128x4xf32>, vector<1x4xf32> -> vector<1x4xf32>
    %c0_36 = arith.constant 0 : index
    %c0_37 = arith.constant 0 : index
    %59 = vector.load %arg12[%c0_36, %c0_37] : memref<128x4xf32, #tpu.memory_space<vmem>>, vector<128x4xf32>
    %cst_38 = arith.constant dense<0.000000e+00> : vector<1x4xf32>
    %60 = tpu.matmul %56, %59, %cst_38 {dimension_numbers = #tpu.dot_dimension_numbers<[1], [0], [0], [1], [0, 0, 1, 1], [], []>} : vector<1x128xf32>, vector<128x4xf32>, vector<1x4xf32> -> vector<1x4xf32>
    %61 = arith.addf %58, %60 : vector<1x4xf32>
    %c0_39 = arith.constant 0 : index
    %c0_40 = arith.constant 0 : index
    %62 = vector.load %arg13[%c0_39, %c0_40] : memref<1x4xf32, #tpu.memory_space<vmem>>, vector<1x4xf32>
    %63 = arith.addf %61, %62 : vector<1x4xf32>
    %c0_41 = arith.constant 0 : index
    %c0_42 = arith.constant 0 : index
    %c0_43 = arith.constant 0 : index
    %64 = vector.load %arg14[%c0_41, %c0_42, %c0_43] : memref<1x1x4xf32, #tpu.memory_space<vmem>>, vector<1x1x4xf32>
    %65 = vector.shape_cast %64 : vector<1x1x4xf32> to vector<1x4xf32>
    %66 = vector.shape_cast %63 : vector<1x4xf32> to vector<1x1x4xf32>
    tpu.vector_store %arg14[%c0_41, %c0_42, %c0_43], %66 {strides = array<i32>} : memref<1x1x4xf32, #tpu.memory_space<vmem>>, vector<1x1x4xf32>,
    return
  }
  func.func @transform_0(%arg0: i32) -> (i32, i32, i32) {
    %c0_i32 = arith.constant 0 : i32
    %c0_i32_0 = arith.constant 0 : i32
    %c0_i32_1 = arith.constant 0 : i32
    return %arg0, %c0_i32, %c0_i32_0 : i32, i32, i32
  }
  func.func @transform_1(%arg0: i32) -> (i32, i32, i32) {
    %c0_i32 = arith.constant 0 : i32
    %c0_i32_0 = arith.constant 0 : i32
    %c0_i32_1 = arith.constant 0 : i32
    return %arg0, %c0_i32, %c0_i32_0 : i32, i32, i32
  }
  func.func @transform_2(%arg0: i32) -> (i32, i32) {
    %c0_i32 = arith.constant 0 : i32
    %c0_i32_0 = arith.constant 0 : i32
    %c0_i32_1 = arith.constant 0 : i32
    return %c0_i32, %c0_i32_0 : i32, i32
  }
  func.func @transform_3(%arg0: i32) -> (i32, i32) {
    %c0_i32 = arith.constant 0 : i32
    %c0_i32_0 = arith.constant 0 : i32
    %c0_i32_1 = arith.constant 0 : i32
    return %c0_i32, %c0_i32_0 : i32, i32
  }
  func.func @transform_4(%arg0: i32) -> (i32, i32) {
    %c0_i32 = arith.constant 0 : i32
    %c0_i32_0 = arith.constant 0 : i32
    %c0_i32_1 = arith.constant 0 : i32
    return %c0_i32, %c0_i32_0 : i32, i32
  }
  func.func @transform_5(%arg0: i32) -> (i32, i32) {
    %c0_i32 = arith.constant 0 : i32
    %c0_i32_0 = arith.constant 0 : i32
    %c0_i32_1 = arith.constant 0 : i32
    return %c0_i32, %c0_i32_0 : i32, i32
  }
  func.func @transform_6(%arg0: i32) -> (i32, i32) {
    %c0_i32 = arith.constant 0 : i32
    %c0_i32_0 = arith.constant 0 : i32
    %c0_i32_1 = arith.constant 0 : i32
    return %c0_i32, %c0_i32_0 : i32, i32
  }
  func.func @transform_7(%arg0: i32) -> (i32, i32) {
    %c0_i32 = arith.constant 0 : i32
    %c0_i32_0 = arith.constant 0 : i32
    %c0_i32_1 = arith.constant 0 : i32
    return %c0_i32, %c0_i32_0 : i32, i32
  }
  func.func @transform_8(%arg0: i32) -> (i32, i32) {
    %c0_i32 = arith.constant 0 : i32
    %c0_i32_0 = arith.constant 0 : i32
    %c0_i32_1 = arith.constant 0 : i32
    return %c0_i32, %c0_i32_0 : i32, i32
  }
  func.func @transform_9(%arg0: i32) -> (i32, i32) {
    %c0_i32 = arith.constant 0 : i32
    %c0_i32_0 = arith.constant 0 : i32
    %c0_i32_1 = arith.constant 0 : i32
    return %c0_i32, %c0_i32_0 : i32, i32
  }
  func.func @transform_10(%arg0: i32) -> (i32, i32) {
    %c0_i32 = arith.constant 0 : i32
    %c0_i32_0 = arith.constant 0 : i32
    %c0_i32_1 = arith.constant 0 : i32
    return %c0_i32, %c0_i32_0 : i32, i32
  }
  func.func @transform_11(%arg0: i32) -> (i32, i32) {
    %c0_i32 = arith.constant 0 : i32
    %c0_i32_0 = arith.constant 0 : i32
    %c0_i32_1 = arith.constant 0 : i32
    return %c0_i32, %c0_i32_0 : i32, i32
  }
  func.func @transform_12(%arg0: i32) -> (i32, i32) {
    %c0_i32 = arith.constant 0 : i32
    %c0_i32_0 = arith.constant 0 : i32
    %c0_i32_1 = arith.constant 0 : i32
    return %c0_i32, %c0_i32_0 : i32, i32
  }
  func.func @transform_13(%arg0: i32) -> (i32, i32, i32) {
    %c0_i32 = arith.constant 0 : i32
    %c0_i32_0 = arith.constant 0 : i32
    %c0_i32_1 = arith.constant 0 : i32
    return %arg0, %c0_i32, %c0_i32_0 : i32, i32, i32
  }
}

</mosaic_0001>

<llo_original>
// kernel: tpu_custom_call.1
$region0: #{tpu_custom_call.1}
  #allocation0 [shape = 'u32[]', space=smem, size = 0x4, offset = 0x4, fixed_abs, tag = 'smem constant byte address 0x4 - core index']
  #allocation1 [shape = 'u32[144,128]{1,0:T(1,128)}', space=vmem, size = 0x12000, scoped, tag = 'internal scratch']
  %s0 = inlined_call_operand.vmem [shape: bf16[2,8,128], index: 0, kind: input, shape index: {}]
  %s1 = inlined_call_operand.hbm [shape: bf16[2,8,128], index: 1, kind: input, shape index: {}]
  %s2 = inlined_call_operand.hbm [shape: bf16[128,128], index: 2, kind: input, shape index: {}]
  %s3 = inlined_call_operand.vmem [shape: f32[1,128], index: 3, kind: input, shape index: {}]
  %s4 = inlined_call_operand.vmem [shape: bf16[128,256], index: 4, kind: input, shape index: {}]
  %s5 = inlined_call_operand.vmem [shape: f32[1,256], index: 5, kind: input, shape index: {}]
  %s6 = inlined_call_operand.hbm [shape: bf16[128,128], index: 6, kind: input, shape index: {}]
  %s7 = inlined_call_operand.vmem [shape: f32[1,128], index: 7, kind: input, shape index: {}]
  %s8 = inlined_call_operand.vmem [shape: bf16[128,256], index: 8, kind: input, shape index: {}]
  %s9 = inlined_call_operand.vmem [shape: f32[1,256], index: 9, kind: input, shape index: {}]
  %s10 = inlined_call_operand.vmem [shape: f32[128,4], index: 10, kind: input, shape index: {}]
  %s11 = inlined_call_operand.vmem [shape: f32[128,4], index: 11, kind: input, shape index: {}]
  %s12 = inlined_call_operand.vmem [shape: f32[1,4], index: 12, kind: input, shape index: {}]
  %s13 = inlined_call_operand.hbm [shape: f32[2,1,4], index: 13, kind: output, shape index: {}]
  %s14 = sld [smem:[#allocation0]]
  $region97: #{tpu_custom_call.1} parent=0
    _
  %s16 = ssub.s32 1, %s14
  %s17 = scalar_select 0, %s16, %s14
  $region1: #{tpu_custom_call.1} parent=0
    #allocation2 [shape = 'u8[4096]{0}', space=vmem, size = 0x1000, scoped, tag = 'input window, operand 1']
    #allocation3 [shape = 's32[2]{0}', space=sflag, size = 0x8, scoped, tag = 'scoped memory for tpu_custom_call.1']
    #allocation4 [shape = 's32[2]{0}', space=sflag, size = 0x8, scoped, tag = 'scoped memory for tpu_custom_call.1']
    #allocation5 [shape = 'u8[32768]{0}', space=vmem, size = 0x8000, scoped, tag = 'input window, operand 2, single buffered']
    #allocation6 [shape = 's32[1]{0}', space=sflag, size = 0x4, scoped, tag = 'scoped memory for tpu_custom_call.1']
    #allocation7 [shape = 'u8[32768]{0}', space=vmem, size = 0x8000, scoped, tag = 'input window, operand 6, single buffered']
    #allocation8 [shape = 'u8[1024]{0}', space=vmem, size = 0x400, scoped, tag = 'output window, operand 0']
    %18 = vsyncpa [#allocation3], 0
    %s19 = scalar_lea.sflag [#allocation3], 1
    %20 = vsyncpa %s19, 0
    %21 = vsyncpa [#allocation6], 0
    %22 = vsyncpa [#allocation4], 0
    %s23 = scalar_lea.sflag [#allocation4], 1
    %24 = vsyncpa %s23, 0
    loop: start=0, step=1, limit=4
    $region2: #{tpu_custom_call.1} parent=1 // loop_pre_header
      _
    $region3: #{tpu_custom_call.1} parent=1 // loop_header
      %s26 = sphi 0, %s30
      %p27 = scmp.ge.s32.totalorder %s26, 4
      %s36 = sphi 0, %s38
      %s39 = sphi 0, %s36
      %s40 = sphi 0, %s39
      %s56 = sphi 0, %s40
      %s62 = sphi 0, %s64
      %s65 = sphi 0, %s62
      %s66 = sphi 0, %s65
      %s82 = sphi 0, %s66
      %s86 = sphi 0, %s86
      %s88 = sphi 0, %s86
      %s89 = sphi 0, %s88
      %s103 = sphi 0, %s89
      %s107 = sphi 0, %s107
      %s109 = sphi 0, %s107
      %s110 = sphi 0, %s109
      %s124 = sphi 0, %s110
      %s128 = sphi 0, %s128
      %s130 = sphi 0, %s128
      %s131 = sphi 0, %s130
      %s145 = sphi 0, %s131
      %s149 = sphi 0, %s149
      %s151 = sphi 0, %s149
      %s152 = sphi 0, %s151
      %s166 = sphi 0, %s152
      %s170 = sphi 0, %s170
      %s172 = sphi 0, %s170
      %s173 = sphi 0, %s172
      %s187 = sphi 0, %s173
      %s191 = sphi 0, %s191
      %s193 = sphi 0, %s191
      %s194 = sphi 0, %s193
      %s208 = sphi 0, %s194
      %s212 = sphi 0, %s212
      %s214 = sphi 0, %s212
      %s215 = sphi 0, %s214
      %s229 = sphi 0, %s215
      %s233 = sphi 0, %s233
      %s235 = sphi 0, %s233
      %s236 = sphi 0, %s235
      %s250 = sphi 0, %s236
      %s254 = sphi 0, %s254
      %s256 = sphi 0, %s254
      %s257 = sphi 0, %s256
      %s271 = sphi 0, %s257
      %s275 = sphi 0, %s275
      %s277 = sphi 0, %s275
      %s278 = sphi 0, %s277
      %s292 = sphi 0, %s278
      %s296 = sphi 0, %s296
      %s298 = sphi 0, %s296
      %s299 = sphi 0, %s298
      %s313 = sphi 0, %s299
      %s319 = sphi 0, %s321
      %s322 = sphi 0, %s319
      %s323 = sphi 0, %s322
      %s339 = sphi 0, %s323
    $region4: #{tpu_custom_call.1} parent=1 // loop_header_branch
      %29 = sbr.rel (%p27) target = $region8
    $region5: #{tpu_custom_call.1} parent=1 // loop_body
      %s31 = ssub.s32 %s26, 1
      %s32 = ssub.s32 %s26, 2
      %s33 = sadd.s32 %s26, 1
      %s34 = ssub.s32 %s26, %s33
      %p35 = scmp.eq.s32.totalorder %s34, 0
      %s37 = sadd.s32 %s36, 1
      %s38 = scalar_select %p35, %s36, %s37
      %p41 = pneg %p35
      %p42 = scmp.eq.s32.totalorder %s26, 1
      %p43 = por %p41, %p42
      %p44 = scmp.ne.s32.totalorder %s36, %s39
      %p45 = scmp.eq.s32.totalorder %s26, 0
      %p46 = por %p44, %p45
      %p47 = scmp.ne.s32.totalorder %s36, %s39
      %p48 = scmp.eq.s32.totalorder %s31, 1
      %p49 = por %p47, %p48
      %p50 = scmp.ne.s32.totalorder %s39, %s40
      %p51 = scmp.eq.s32.totalorder %s31, 0
      %p52 = por %p50, %p51
      %p53 = scmp.ne.s32.totalorder %s39, %s40
      %p54 = scmp.eq.s32.totalorder %s32, 1
      %p55 = por %p53, %p54
      %p57 = scmp.ne.s32.totalorder %s40, %s56
      %p58 = scmp.eq.s32.totalorder %s32, 0
      %p59 = por %p57, %p58
      %s60 = ssub.s32 %s26, %s33
      %p61 = scmp.eq.s32.totalorder %s60, 0
      %s63 = sadd.s32 %s62, 1
      %s64 = scalar_select %p61, %s62, %s63
      %p67 = pneg %p61
      %p68 = scmp.eq.s32.totalorder %s26, 1
      %p69 = por %p67, %p68
      %p70 = scmp.ne.s32.totalorder %s62, %s65
      %p71 = scmp.eq.s32.totalorder %s26, 0
      %p72 = por %p70, %p71
      %p73 = scmp.ne.s32.totalorder %s62, %s65
      %p74 = scmp.eq.s32.totalorder %s31, 1
      %p75 = por %p73, %p74
      %p76 = scmp.ne.s32.totalorder %s65, %s66
      %p77 = scmp.eq.s32.totalorder %s31, 0
      %p78 = por %p76, %p77
      %p79 = scmp.ne.s32.totalorder %s65, %s66
      %p80 = scmp.eq.s32.totalorder %s32, 1
      %p81 = por %p79, %p80
      %p83 = scmp.ne.s32.totalorder %s66, %s82
      %p84 = scmp.eq.s32.totalorder %s32, 0
      %p85 = por %p83, %p84
      %s87 = sadd.s32 %s86, 1
      %p90 = scmp.eq.s32.totalorder %s26, 1
      %p91 = scmp.ne.s32.totalorder %s86, %s88
      %p92 = scmp.eq.s32.totalorder %s26, 0
      %p93 = por %p91, %p92
      %p94 = scmp.ne.s32.totalorder %s86, %s88
      %p95 = scmp.eq.s32.totalorder %s31, 1
      %p96 = por %p94, %p95
      %p97 = scmp.ne.s32.totalorder %s88, %s89
      %p98 = scmp.eq.s32.totalorder %s31, 0
      %p99 = por %p97, %p98
      %p100 = scmp.ne.s32.totalorder %s88, %s89
      %p101 = scmp.eq.s32.totalorder %s32, 1
      %p102 = por %p100, %p101
      %p104 = scmp.ne.s32.totalorder %s89, %s103
      %p105 = scmp.eq.s32.totalorder %s32, 0
      %p106 = por %p104, %p105
      %s108 = sadd.s32 %s107, 1
      %p111 = scmp.eq.s32.totalorder %s26, 1
      %p112 = scmp.ne.s32.totalorder %s107, %s109
      %p113 = scmp.eq.s32.totalorder %s26, 0
      %p114 = por %p112, %p113
      %p115 = scmp.ne.s32.totalorder %s107, %s109
      %p116 = scmp.eq.s32.totalorder %s31, 1
      %p117 = por %p115, %p116
      %p118 = scmp.ne.s32.totalorder %s109, %s110
      %p119 = scmp.eq.s32.totalorder %s31, 0
      %p120 = por %p118, %p119
      %p121 = scmp.ne.s32.totalorder %s109, %s110
      %p122 = scmp.eq.s32.totalorder %s32, 1
      %p123 = por %p121, %p122
      %p125 = scmp.ne.s32.totalorder %s110, %s124
      %p126 = scmp.eq.s32.totalorder %s32, 0
      %p127 = por %p125, %p126
      %s129 = sadd.s32 %s128, 1
      %p132 = scmp.eq.s32.totalorder %s26, 1
      %p133 = scmp.ne.s32.totalorder %s128, %s130
      %p134 = scmp.eq.s32.totalorder %s26, 0
      %p135 = por %p133, %p134
      %p136 = scmp.ne.s32.totalorder %s128, %s130
      %p137 = scmp.eq.s32.totalorder %s31, 1
      %p138 = por %p136, %p137
      %p139 = scmp.ne.s32.totalorder %s130, %s131
      %p140 = scmp.eq.s32.totalorder %s31, 0
      %p141 = por %p139, %p140
      %p142 = scmp.ne.s32.totalorder %s130, %s131
      %p143 = scmp.eq.s32.totalorder %s32, 1
      %p144 = por %p142, %p143
      %p146 = scmp.ne.s32.totalorder %s131, %s145
      %p147 = scmp.eq.s32.totalorder %s32, 0
      %p148 = por %p146, %p147
      %s150 = sadd.s32 %s149, 1
      %p153 = scmp.eq.s32.totalorder %s26, 1
      %p154 = scmp.ne.s32.totalorder %s149, %s151
      %p155 = scmp.eq.s32.totalorder %s26, 0
      %p156 = por %p154, %p155
      %p157 = scmp.ne.s32.totalorder %s149, %s151
      %p158 = scmp.eq.s32.totalorder %s31, 1
      %p159 = por %p157, %p158
      %p160 = scmp.ne.s32.totalorder %s151, %s152
      %p161 = scmp.eq.s32.totalorder %s31, 0
      %p162 = por %p160, %p161
      %p163 = scmp.ne.s32.totalorder %s151, %s152
      %p164 = scmp.eq.s32.totalorder %s32, 1
      %p165 = por %p163, %p164
      %p167 = scmp.ne.s32.totalorder %s152, %s166
      %p168 = scmp.eq.s32.totalorder %s32, 0
      %p169 = por %p167, %p168
      %s171 = sadd.s32 %s170, 1
      %p174 = scmp.eq.s32.totalorder %s26, 1
      %p175 = scmp.ne.s32.totalorder %s170, %s172
      %p176 = scmp.eq.s32.totalorder %s26, 0
      %p177 = por %p175, %p176
      %p178 = scmp.ne.s32.totalorder %s170, %s172
      %p179 = scmp.eq.s32.totalorder %s31, 1
      %p180 = por %p178, %p179
      %p181 = scmp.ne.s32.totalorder %s172, %s173
      %p182 = scmp.eq.s32.totalorder %s31, 0
      %p183 = por %p181, %p182
      %p184 = scmp.ne.s32.totalorder %s172, %s173
      %p185 = scmp.eq.s32.totalorder %s32, 1
      %p186 = por %p184, %p185
      %p188 = scmp.ne.s32.totalorder %s173, %s187
      %p189 = scmp.eq.s32.totalorder %s32, 0
      %p190 = por %p188, %p189
      %s192 = sadd.s32 %s191, 1
      %p195 = scmp.eq.s32.totalorder %s26, 1
      %p196 = scmp.ne.s32.totalorder %s191, %s193
      %p197 = scmp.eq.s32.totalorder %s26, 0
      %p198 = por %p196, %p197
      %p199 = scmp.ne.s32.totalorder %s191, %s193
      %p200 = scmp.eq.s32.totalorder %s31, 1
      %p201 = por %p199, %p200
      %p202 = scmp.ne.s32.totalorder %s193, %s194
      %p203 = scmp.eq.s32.totalorder %s31, 0
      %p204 = por %p202, %p203
      %p205 = scmp.ne.s32.totalorder %s193, %s194
      %p206 = scmp.eq.s32.totalorder %s32, 1
      %p207 = por %p205, %p206
      %p209 = scmp.ne.s32.totalorder %s194, %s208
      %p210 = scmp.eq.s32.totalorder %s32, 0
      %p211 = por %p209, %p210
      %s213 = sadd.s32 %s212, 1
      %p216 = scmp.eq.s32.totalorder %s26, 1
      %p217 = scmp.ne.s32.totalorder %s212, %s214
      %p218 = scmp.eq.s32.totalorder %s26, 0
      %p219 = por %p217, %p218
      %p220 = scmp.ne.s32.totalorder %s212, %s214
      %p221 = scmp.eq.s32.totalorder %s31, 1
      %p222 = por %p220, %p221
      %p223 = scmp.ne.s32.totalorder %s214, %s215
      %p224 = scmp.eq.s32.totalorder %s31, 0
      %p225 = por %p223, %p224
      %p226 = scmp.ne.s32.totalorder %s214, %s215
      %p227 = scmp.eq.s32.totalorder %s32, 1
      %p228 = por %p226, %p227
      %p230 = scmp.ne.s32.totalorder %s215, %s229
      %p231 = scmp.eq.s32.totalorder %s32, 0
      %p232 = por %p230, %p231
      %s234 = sadd.s32 %s233, 1
      %p237 = scmp.eq.s32.totalorder %s26, 1
      %p238 = scmp.ne.s32.totalorder %s233, %s235
      %p239 = scmp.eq.s32.totalorder %s26, 0
      %p240 = por %p238, %p239
      %p241 = scmp.ne.s32.totalorder %s233, %s235
      %p242 = scmp.eq.s32.totalorder %s31, 1
      %p243 = por %p241, %p242
      %p244 = scmp.ne.s32.totalorder %s235, %s236
      %p245 = scmp.eq.s32.totalorder %s31, 0
      %p246 = por %p244, %p245
      %p247 = scmp.ne.s32.totalorder %s235, %s236
      %p248 = scmp.eq.s32.totalorder %s32, 1
      %p249 = por %p247, %p248
      %p251 = scmp.ne.s32.totalorder %s236, %s250
      %p252 = scmp.eq.s32.totalorder %s32, 0
      %p253 = por %p251, %p252
      %s255 = sadd.s32 %s254, 1
      %p258 = scmp.eq.s32.totalorder %s26, 1
      %p259 = scmp.ne.s32.totalorder %s254, %s256
      %p260 = scmp.eq.s32.totalorder %s26, 0
      %p261 = por %p259, %p260
      %p262 = scmp.ne.s32.totalorder %s254, %s256
      %p263 = scmp.eq.s32.totalorder %s31, 1
      %p264 = por %p262, %p263
      %p265 = scmp.ne.s32.totalorder %s256, %s257
      %p266 = scmp.eq.s32.totalorder %s31, 0
      %p267 = por %p265, %p266
      %p268 = scmp.ne.s32.totalorder %s256, %s257
      %p269 = scmp.eq.s32.totalorder %s32, 1
      %p270 = por %p268, %p269
      %p272 = scmp.ne.s32.totalorder %s257, %s271
      %p273 = scmp.eq.s32.totalorder %s32, 0
      %p274 = por %p272, %p273
      %s276 = sadd.s32 %s275, 1
      %p279 = scmp.eq.s32.totalorder %s26, 1
      %p280 = scmp.ne.s32.totalorder %s275, %s277
      %p281 = scmp.eq.s32.totalorder %s26, 0
      %p282 = por %p280, %p281
      %p283 = scmp.ne.s32.totalorder %s275, %s277
      %p284 = scmp.eq.s32.totalorder %s31, 1
      %p285 = por %p283, %p284
      %p286 = scmp.ne.s32.totalorder %s277, %s278
      %p287 = scmp.eq.s32.totalorder %s31, 0
      %p288 = por %p286, %p287
      %p289 = scmp.ne.s32.totalorder %s277, %s278
      %p290 = scmp.eq.s32.totalorder %s32, 1
      %p291 = por %p289, %p290
      %p293 = scmp.ne.s32.totalorder %s278, %s292
      %p294 = scmp.eq.s32.totalorder %s32, 0
      %p295 = por %p293, %p294
      %s297 = sadd.s32 %s296, 1
      %p300 = scmp.eq.s32.totalorder %s26, 1
      %p301 = scmp.ne.s32.totalorder %s296, %s298
      %p302 = scmp.eq.s32.totalorder %s26, 0
      %p303 = por %p301, %p302
      %p304 = scmp.ne.s32.totalorder %s296, %s298
      %p305 = scmp.eq.s32.totalorder %s31, 1
      %p306 = por %p304, %p305
      %p307 = scmp.ne.s32.totalorder %s298, %s299
      %p308 = scmp.eq.s32.totalorder %s31, 0
      %p309 = por %p307, %p308
      %p310 = scmp.ne.s32.totalorder %s298, %s299
      %p311 = scmp.eq.s32.totalorder %s32, 1
      %p312 = por %p310, %p311
      %p314 = scmp.ne.s32.totalorder %s299, %s313
      %p315 = scmp.eq.s32.totalorder %s32, 0
      %p316 = por %p314, %p315
      %s317 = ssub.s32 %s26, %s33
      %p318 = scmp.eq.s32.totalorder %s317, 0
      %s320 = sadd.s32 %s319, 1
      %s321 = scalar_select %p318, %s319, %s320
      %p324 = pneg %p318
      %p325 = scmp.eq.s32.totalorder %s26, 1
      %p326 = por %p324, %p325
      %p327 = scmp.ne.s32.totalorder %s319, %s322
      %p328 = scmp.eq.s32.totalorder %s26, 0
      %p329 = por %p327, %p328
      %p330 = scmp.ne.s32.totalorder %s319, %s322
      %p331 = scmp.eq.s32.totalorder %s31, 1
      %p332 = por %p330, %p331
      %p333 = scmp.ne.s32.totalorder %s322, %s323
      %p334 = scmp.eq.s32.totalorder %s31, 0
      %p335 = por %p333, %p334
      %p336 = scmp.ne.s32.totalorder %s322, %s323
      %p337 = scmp.eq.s32.totalorder %s32, 1
      %p338 = por %p336, %p337
      %p340 = scmp.ne.s32.totalorder %s323, %s339
      %p341 = scmp.eq.s32.totalorder %s32, 0
      %p342 = por %p340, %p341
      %p343 = scmp.le.s32.totalorder 1, %s26
      %p344 = scmp.lt.s32.totalorder %s26, 3
      %p345 = pnand %p343, %p344
      %p346 = pneg %p345
      // Predicated region
      $region9: #{tpu_custom_call.1} parent=5 // pred_check
        _
      $region10: #{tpu_custom_call.1} parent=5 // pred_check_branch
        %348 = sbr.rel (%p345) target = $region12
      $region11: #{tpu_custom_call.1} parent=5 // pred_region
        %s349 = ssub.s32 %s26, 1
        // Predicated region
        $region13: #{tpu_custom_call.1} parent=11 // pred_check
          %p350 = pneg %p99
        $region14: #{tpu_custom_call.1} parent=11 // pred_check_branch
          %352 = sbr.rel (%p350) target = $region16
        $region15: #{tpu_custom_call.1} parent=11 // pred_region
          %s354 = ssub.s32 1024, 1024
          %355 = vsyncadd [#allocation6], %s354
          %s356 = sshll.u32 [#allocation5], 4
          %s357 = int_to_ptr.vmem [resolvable:$true] %s356
          %362 = dma.hbm_to_vmem [thread:$0]  %s2, 1024, %s357, [#allocation6], 64, 64, 4
        $region16: #{tpu_custom_call.1} parent=11 // pred_fallthru
          _
        // Predicated region
        $region17: #{tpu_custom_call.1} parent=11 // pred_check
          %p363 = pneg %p120
        $region18: #{tpu_custom_call.1} parent=11 // pred_check_branch
          %365 = sbr.rel (%p363) target = $region20
        $region19: #{tpu_custom_call.1} parent=11 // pred_region
          _
        $region20: #{tpu_custom_call.1} parent=11 // pred_fallthru
          _
        // Predicated region
        $region21: #{tpu_custom_call.1} parent=11 // pred_check
          %p366 = pneg %p141
        $region22: #{tpu_custom_call.1} parent=11 // pred_check_branch
          %368 = sbr.rel (%p366) target = $region24
        $region23: #{tpu_custom_call.1} parent=11 // pred_region
          _
        $region24: #{tpu_custom_call.1} parent=11 // pred_fallthru
          _
        // Predicated region
        $region25: #{tpu_custom_call.1} parent=11 // pred_check
          %p369 = pneg %p162
        $region26: #{tpu_custom_call.1} parent=11 // pred_check_branch
          %371 = sbr.rel (%p369) target = $region28
        $region27: #{tpu_custom_call.1} parent=11 // pred_region
          _
        $region28: #{tpu_custom_call.1} parent=11 // pred_fallthru
          _
        // Predicated region
        $region29: #{tpu_custom_call.1} parent=11 // pred_check
          %p372 = pneg %p183
        $region30: #{tpu_custom_call.1} parent=11 // pred_check_branch
          %374 = sbr.rel (%p372) target = $region32
        $region31: #{tpu_custom_call.1} parent=11 // pred_region
          %s376 = ssub.s32 1024, 1024
          %377 = vsyncadd [#allocation6], %s376
          %s378 = sshll.u32 [#allocation7], 4
          %s379 = int_to_ptr.vmem [resolvable:$true] %s378
          %384 = dma.hbm_to_vmem [thread:$0]  %s6, 1024, %s379, [#allocation6], 64, 64, 4
        $region32: #{tpu_custom_call.1} parent=11 // pred_fallthru
          _
        // Predicated region
        $region33: #{tpu_custom_call.1} parent=11 // pred_check
          %p385 = pneg %p204
        $region34: #{tpu_custom_call.1} parent=11 // pred_check_branch
          %387 = sbr.rel (%p385) target = $region36
        $region35: #{tpu_custom_call.1} parent=11 // pred_region
          _
        $region36: #{tpu_custom_call.1} parent=11 // pred_fallthru
          _
        // Predicated region
        $region37: #{tpu_custom_call.1} parent=11 // pred_check
          %p388 = pneg %p225
        $region38: #{tpu_custom_call.1} parent=11 // pred_check_branch
          %390 = sbr.rel (%p388) target = $region40
        $region39: #{tpu_custom_call.1} parent=11 // pred_region
          _
        $region40: #{tpu_custom_call.1} parent=11 // pred_fallthru
          _
        // Predicated region
        $region41: #{tpu_custom_call.1} parent=11 // pred_check
          %p391 = pneg %p246
        $region42: #{tpu_custom_call.1} parent=11 // pred_check_branch
          %393 = sbr.rel (%p391) target = $region44
        $region43: #{tpu_custom_call.1} parent=11 // pred_region
          _
        $region44: #{tpu_custom_call.1} parent=11 // pred_fallthru
          _
        // Predicated region
        $region45: #{tpu_custom_call.1} parent=11 // pred_check
          %p394 = pneg %p267
        $region46: #{tpu_custom_call.1} parent=11 // pred_check_branch
          %396 = sbr.rel (%p394) target = $region48
        $region47: #{tpu_custom_call.1} parent=11 // pred_region
          _
        $region48: #{tpu_custom_call.1} parent=11 // pred_fallthru
          _
        // Predicated region
        $region49: #{tpu_custom_call.1} parent=11 // pred_check
          %p397 = pneg %p288
        $region50: #{tpu_custom_call.1} parent=11 // pred_check_branch
          %399 = sbr.rel (%p397) target = $region52
        $region51: #{tpu_custom_call.1} parent=11 // pred_region
          _
        $region52: #{tpu_custom_call.1} parent=11 // pred_fallthru
          _
        // Predicated region
        $region53: #{tpu_custom_call.1} parent=11 // pred_check
          %p400 = pneg %p309
        $region54: #{tpu_custom_call.1} parent=11 // pred_check_branch
          %402 = sbr.rel (%p400) target = $region56
        $region55: #{tpu_custom_call.1} parent=11 // pred_region
          _
        $region56: #{tpu_custom_call.1} parent=11 // pred_fallthru
          _
      $region12: #{tpu_custom_call.1} parent=5 // pred_fallthru
        _
      %p403 = scmp.lt.s32.totalorder %s26, 2
      // Predicated region
      $region57: #{tpu_custom_call.1} parent=5 // pred_check
        %p404 = pneg %p403
      $region58: #{tpu_custom_call.1} parent=5 // pred_check_branch
        %406 = sbr.rel (%p404) target = $region60
      $region59: #{tpu_custom_call.1} parent=5 // pred_region
        // Predicated region
        $region61: #{tpu_custom_call.1} parent=59 // pred_check
          %p407 = pneg %p46
        $region62: #{tpu_custom_call.1} parent=59 // pred_check_branch
          %409 = sbr.rel (%p407) target = $region64
        $region63: #{tpu_custom_call.1} parent=59 // pred_region
          %p410 = scmp.lt.s32.totalorder %s26, 1
          %s411 = scalar_select %p410, %s26, 1
          %s412 = smul.addr %s411, 4
          %s413 = scalar_lea.vmem %s0, %s412
        $region64: #{tpu_custom_call.1} parent=59 // pred_fallthru
          _
        // Predicated region
        $region65: #{tpu_custom_call.1} parent=59 // pred_check
          %p414 = pneg %p72
        $region66: #{tpu_custom_call.1} parent=59 // pred_check_branch
          %416 = sbr.rel (%p414) target = $region68
        $region67: #{tpu_custom_call.1} parent=59 // pred_region
          %s417 = sand.u32 %s62, 1
          %s418 = scalar_lea.sflag [#allocation3], %s417
          %s419 = sand.u32 %s62, 1
          %s420 = smul.addr %s419, 4
          %s421 = scalar_lea.vmem [#allocation2], %s420
          %s423 = ssub.s32 64, 64
          %424 = vsyncadd %s418, %s423
          %s425 = smul.addr %s26, 64
          %s426 = scalar_lea.hbm %s1, %s425
          %s428 = sshll.u32 %s421, 4
          %s429 = int_to_ptr.vmem [resolvable:$true] %s428
          %431 = dma.hbm_to_vmem [thread:$0]  %s426, 64, %s429, %s418
        $region68: #{tpu_custom_call.1} parent=59 // pred_fallthru
          _
      $region60: #{tpu_custom_call.1} parent=5 // pred_fallthru
        _
      %p432 = scmp.le.s32.totalorder 1, %s26
      %p433 = scmp.lt.s32.totalorder %s26, 3
      %p434 = pnand %p432, %p433
      %p435 = pneg %p434
      // Predicated region
      $region69: #{tpu_custom_call.1} parent=5 // pred_check
        _
      $region70: #{tpu_custom_call.1} parent=5 // pred_check_branch
        %437 = sbr.rel (%p434) target = $region72
      $region71: #{tpu_custom_call.1} parent=5 // pred_region
        %s438 = ssub.s32 %s26, 1
        %s439 = sand.u32 %s65, 1
        %s440 = scalar_lea.sflag [#allocation3], %s439
        %s441 = sand.u32 %s65, 1
        %s442 = smul.addr %s441, 4
        %s443 = scalar_lea.vmem [#allocation2], %s442
        // Predicated region
        $region73: #{tpu_custom_call.1} parent=71 // pred_check
          %p444 = pneg %p78
        $region74: #{tpu_custom_call.1} parent=71 // pred_check_branch
          %446 = sbr.rel (%p444) target = $region76
        $region75: #{tpu_custom_call.1} parent=71 // pred_region
          %447 = dma.done %s440, 64
        $region76: #{tpu_custom_call.1} parent=71 // pred_fallthru
          _
        // Predicated region
        $region77: #{tpu_custom_call.1} parent=71 // pred_check
          %p448 = pneg %p99
        $region78: #{tpu_custom_call.1} parent=71 // pred_check_branch
          %450 = sbr.rel (%p448) target = $region80
        $region79: #{tpu_custom_call.1} parent=71 // pred_region
          %451 = dma.done [#allocation6], 1024
        $region80: #{tpu_custom_call.1} parent=71 // pred_fallthru
          _
        // Predicated region
        $region81: #{tpu_custom_call.1} parent=71 // pred_check
          %p452 = pneg %p183
        $region82: #{tpu_custom_call.1} parent=71 // pred_check_branch
          %454 = sbr.rel (%p452) target = $region84
        $region83: #{tpu_custom_call.1} parent=71 // pred_region
          %455 = dma.done [#allocation6], 1024
        $region84: #{tpu_custom_call.1} parent=71 // pred_fallthru
          _
        %p456 = scmp.lt.s32.totalorder %s31, 1
        %s457 = scalar_select %p456, %s31, 1
        %s458 = smul.addr %s457, 4
        %s459 = scalar_lea.vmem %s0, %s458
        %p460 = pneg %p52
        %p461 = pneg %p49
        %s462 = sand.u32 %s65, 1
        %s463 = scalar_lea.sflag [#allocation3], %s462
        %s464 = sand.u32 %s65, 1
        %s465 = smul.addr %s464, 4
        %s466 = scalar_lea.vmem [#allocation2], %s465
        %p467 = pneg %p78
        %p468 = pneg %p75
        %p469 = pneg %p99
        %p470 = pneg %p96
        %p471 = pneg %p120
        %p472 = pneg %p117
        %p473 = pneg %p141
        %p474 = pneg %p138
        %p475 = pneg %p162
        %p476 = pneg %p159
        %p477 = pneg %p183
        %p478 = pneg %p180
        %p479 = pneg %p204
        %p480 = pneg %p201
        %p481 = pneg %p225
        %p482 = pneg %p222
        %p483 = pneg %p246
        %p484 = pneg %p243
        %p485 = pneg %p267
        %p486 = pneg %p264
        %p487 = pneg %p288
        %p488 = pneg %p285
        %p489 = pneg %p309
        %p490 = pneg %p306
        %p491 = pneg %p335
        %p492 = pneg %p332
        %s493 = sand.u32 %s322, 1
        %s494 = scalar_lea.sflag [#allocation4], %s493
        %s495 = sand.u32 %s322, 1
        %s496 = scalar_lea.vmem [#allocation8], %s495
        %p497 = scmp.lt.s32.totalorder %s31, 1
        %s498 = scalar_select %p497, %s31, 1
        %s499 = smul.addr %s498, 4
        %s500 = scalar_lea.vmem %s0, %s499
        %v502 = vld [vmem:[%s500] sm:$0xf]
        %v503 = vld [vmem:[%s443] sm:$0xf]
        %v504 = vld [vmem:[%s4] sm:$0xff]
        %v505 = vld [vmem:[%s4 + $0x8] sm:$0xff]
        %v506 = vld [vmem:[%s4 + $0x10] sm:$0xff]
        %v507 = vld [vmem:[%s4 + $0x18] sm:$0xff]
        %v508 = vld [vmem:[%s4 + $0x20] sm:$0xff]
        %v509 = vld [vmem:[%s4 + $0x28] sm:$0xff]
        %v510 = vld [vmem:[%s4 + $0x30] sm:$0xff]
        %v511 = vld [vmem:[%s4 + $0x38] sm:$0xff]
        %v512 = vld [vmem:[%s4 + $0x40] sm:$0xff]
        %v513 = vld [vmem:[%s4 + $0x48] sm:$0xff]
        %v514 = vld [vmem:[%s4 + $0x50] sm:$0xff]
        %v515 = vld [vmem:[%s4 + $0x58] sm:$0xff]
        %v516 = vld [vmem:[%s4 + $0x60] sm:$0xff]
        %v517 = vld [vmem:[%s4 + $0x68] sm:$0xff]
        %v518 = vld [vmem:[%s4 + $0x70] sm:$0xff]
        %v519 = vld [vmem:[%s4 + $0x78] sm:$0xff]
        %v520 = vld [vmem:[%s5] sm:$0x3]
        %v522 = vlaneseq
        %v523 = vshrl.u32 %v522, 7
        %v524 = vsub.s32 0, %v523
        %v525 = vrot.slane %v520, %v524
        %v526 = vlaneseq
        %v527 = vshrl.u32 %v526, 7
        %v528 = vsub.s32 1, %v527
        %v529 = vrot.slane %v520, %v528
        %v548 = vunpack.c.l.b16 %v504
        %v549 = vunpack.c.h.b16 %v504
        %v550 = vunpack.c.l.b16 %v505
        %v551 = vunpack.c.h.b16 %v505
        %v552 = vunpack.c.l.b16 %v506
        %v553 = vunpack.c.h.b16 %v506
        %v554 = vunpack.c.l.b16 %v507
        %v555 = vunpack.c.h.b16 %v507
        %v556 = vunpack.c.l.b16 %v508
        %v557 = vunpack.c.h.b16 %v508
        %v558 = vunpack.c.l.b16 %v509
        %v559 = vunpack.c.h.b16 %v509
        %v560 = vunpack.c.l.b16 %v510
        %v561 = vunpack.c.h.b16 %v510
        %v562 = vunpack.c.l.b16 %v511
        %v563 = vunpack.c.h.b16 %v511
        %v564 = vunpack.c.l.b16 %v512
        %v565 = vunpack.c.h.b16 %v512
        %v566 = vunpack.c.l.b16 %v513
        %v567 = vunpack.c.h.b16 %v513
        %v568 = vunpack.c.l.b16 %v514
        %v569 = vunpack.c.h.b16 %v514
        %v570 = vunpack.c.l.b16 %v515
        %v571 = vunpack.c.h.b16 %v515
        %v572 = vunpack.c.l.b16 %v516
        %v573 = vunpack.c.h.b16 %v516
        %v574 = vunpack.c.l.b16 %v517
        %v575 = vunpack.c.h.b16 %v517
        %v576 = vunpack.c.l.b16 %v518
        %v577 = vunpack.c.h.b16 %v518
        %v578 = vunpack.c.l.b16 %v519
        %v579 = vunpack.c.h.b16 %v519
        %v580 = vpack.c.b16 %v550, %v548
        %v581 = vpack.c.b16 %v551, %v549
        %v582 = vpack.c.b16 %v554, %v552
        %v583 = vpack.c.b16 %v555, %v553
        %v584 = vpack.c.b16 %v558, %v556
        %v585 = vpack.c.b16 %v559, %v557
        %v586 = vpack.c.b16 %v562, %v560
        %v587 = vpack.c.b16 %v563, %v561
        %v588 = vpack.c.b16 %v566, %v564
        %v589 = vpack.c.b16 %v567, %v565
        %v590 = vpack.c.b16 %v570, %v568
        %v591 = vpack.c.b16 %v571, %v569
        %v592 = vpack.c.b16 %v574, %v572
        %v593 = vpack.c.b16 %v575, %v573
        %v594 = vpack.c.b16 %v578, %v576
        %v595 = vpack.c.b16 %v579, %v577
        %612 = vmatprep.subr.bf16.mxu0 %v581
        %613 = vmatpush1.bf16.msra.mxu0 %v580
        %614 = vmatprep.subr.bf16.mxu0 %v583
        %615 = vmatpush1.bf16.msra.mxu0 %v582
        %616 = vmatprep.subr.bf16.mxu0 %v585
        %617 = vmatpush1.bf16.msra.mxu0 %v584
        %618 = vmatprep.subr.bf16.mxu0 %v587
        %619 = vmatpush1.bf16.msra.mxu0 %v586
        %620 = vmatprep.subr.bf16.mxu0 %v589
        %621 = vmatpush1.bf16.msra.mxu0 %v588
        %622 = vmatprep.subr.bf16.mxu0 %v591
        %623 = vmatpush1.bf16.msra.mxu0 %v590
        %624 = vmatprep.subr.bf16.mxu0 %v593
        %625 = vmatpush1.bf16.msra.mxu0 %v592
        %626 = vmatprep.subr.bf16.mxu0 %v595
        %627 = vmatpush1.bf16.msra.mxu0 %v594
        %628 = vmatprep.subr.bf16.mxu0 0
        %629 = vmatpush1.bf16.msra.mxu0 0
        %630 = vmatprep.subr.bf16.mxu0 0
        %631 = vmatpush1.bf16.msra.mxu0 0
        %632 = vmatprep.subr.bf16.mxu0 0
        %633 = vmatpush1.bf16.msra.mxu0 0
        %634 = vmatprep.subr.bf16.mxu0 0
        %635 = vmatpush1.bf16.msra.mxu0 0
        %636 = vmatprep.subr.bf16.mxu0 0
        %637 = vmatpush1.bf16.msra.mxu0 0
        %638 = vmatprep.subr.bf16.mxu0 0
        %639 = vmatpush1.bf16.msra.mxu0 0
        %640 = vmatprep.subr.bf16.mxu0 0
        %641 = vmatpush1.bf16.msra.mxu0 0
        %642 = vmatprep.subr.bf16.mxu0 0
        %643 = vmatpush1.bf16.msra.mxu0 0
        %644 = vmatprep.mubr.bf16.mxu0 0
        %645 = vmatmul.mubr.bf16.gmra.mrb[0].mxu0 %v502
        %v646 = vpop.f32.mrb[0].mxu0
        %v647 = vadd.f32 %v525, %v646
        %v648 = vpop.f32.mrb[0].mxu0
        %v649 = vadd.f32 %v529, %v648
        %v650 = vpop.f32.mrb[0].mxu0
        %v651 = vpop.f32.mrb[0].mxu0
        %652 = vdwg.mxu0
        %v653 = vld [vmem:[#allocation5] sm:$0xf]
        %v654 = vld [vmem:[#allocation5 + $0x4] sm:$0xf]
        %v655 = vld [vmem:[#allocation5 + $0x8] sm:$0xf]
        %v656 = vld [vmem:[#allocation5 + $0xc] sm:$0xf]
        %v657 = vld [vmem:[#allocation5 + $0x10] sm:$0xf]
        %v658 = vld [vmem:[#allocation5 + $0x14] sm:$0xf]
        %v659 = vld [vmem:[#allocation5 + $0x18] sm:$0xf]
        %v660 = vld [vmem:[#allocation5 + $0x1c] sm:$0xf]
        %v661 = vld [vmem:[#allocation5 + $0x20] sm:$0xf]
        %v662 = vld [vmem:[#allocation5 + $0x24] sm:$0xf]
        %v663 = vld [vmem:[#allocation5 + $0x28] sm:$0xf]
        %v664 = vld [vmem:[#allocation5 + $0x2c] sm:$0xf]
        %v665 = vld [vmem:[#allocation5 + $0x30] sm:$0xf]
        %v666 = vld [vmem:[#allocation5 + $0x34] sm:$0xf]
        %v667 = vld [vmem:[#allocation5 + $0x38] sm:$0xf]
        %v668 = vld [vmem:[#allocation5 + $0x3c] sm:$0xf]
        %v669 = vld [vmem:[%s3] sm:$0x1]
        %v686 = vunpack.c.l.b16 %v653
        %v687 = vunpack.c.l.b16 %v654
        %v688 = vunpack.c.l.b16 %v655
        %v689 = vunpack.c.l.b16 %v656
        %v690 = vunpack.c.l.b16 %v657
        %v691 = vunpack.c.l.b16 %v658
        %v692 = vunpack.c.l.b16 %v659
        %v693 = vunpack.c.l.b16 %v660
        %v694 = vunpack.c.l.b16 %v661
        %v695 = vunpack.c.l.b16 %v662
        %v696 = vunpack.c.l.b16 %v663
        %v697 = vunpack.c.l.b16 %v664
        %v698 = vunpack.c.l.b16 %v665
        %v699 = vunpack.c.l.b16 %v666
        %v700 = vunpack.c.l.b16 %v667
        %v701 = vunpack.c.l.b16 %v668
        %v702 = vpack.c.b16 %v687, %v686
        %v703 = vpack.c.b16 %v689, %v688
        %v704 = vpack.c.b16 %v691, %v690
        %v705 = vpack.c.b16 %v693, %v692
        %v706 = vpack.c.b16 %v695, %v694
        %v707 = vpack.c.b16 %v697, %v696
        %v708 = vpack.c.b16 %v699, %v698
        %v709 = vpack.c.b16 %v701, %v700
        %718 = vmatprep.subr.bf16.mxu0 0
        %719 = vmatpush1.bf16.msra.mxu0 %v702
        %720 = vmatprep.subr.bf16.mxu0 0
        %721 = vmatpush1.bf16.msra.mxu0 %v703
        %722 = vmatprep.subr.bf16.mxu0 0
        %723 = vmatpush1.bf16.msra.mxu0 %v704
        %724 = vmatprep.subr.bf16.mxu0 0
        %725 = vmatpush1.bf16.msra.mxu0 %v705
        %726 = vmatprep.subr.bf16.mxu0 0
        %727 = vmatpush1.bf16.msra.mxu0 %v706
        %728 = vmatprep.subr.bf16.mxu0 0
        %729 = vmatpush1.bf16.msra.mxu0 %v707
        %730 = vmatprep.subr.bf16.mxu0 0
        %731 = vmatpush1.bf16.msra.mxu0 %v708
        %732 = vmatprep.subr.bf16.mxu0 0
        %733 = vmatpush1.bf16.msra.mxu0 %v709
        %734 = vmatprep.subr.bf16.mxu0 0
        %735 = vmatpush1.bf16.msra.mxu0 0
        %736 = vmatprep.subr.bf16.mxu0 0
        %737 = vmatpush1.bf16.msra.mxu0 0
        %738 = vmatprep.subr.bf16.mxu0 0
        %739 = vmatpush1.bf16.msra.mxu0 0
        %740 = vmatprep.subr.bf16.mxu0 0
        %741 = vmatpush1.bf16.msra.mxu0 0
        %742 = vmatprep.subr.bf16.mxu0 0
        %743 = vmatpush1.bf16.msra.mxu0 0
        %744 = vmatprep.subr.bf16.mxu0 0
        %745 = vmatpush1.bf16.msra.mxu0 0
        %746 = vmatprep.subr.bf16.mxu0 0
        %747 = vmatpush1.bf16.msra.mxu0 0
        %748 = vmatprep.subr.bf16.mxu0 0
        %749 = vmatpush1.bf16.msra.mxu0 0
        %750 = vmatprep.mubr.bf16.mxu0 0
        %751 = vmatmul.mubr.bf16.gmra.mrb[0].mxu0 %v502
        %v752 = vpop.f32.mrb[0].mxu0
        %v753 = vadd.f32 %v669, %v752
        %v754 = vpop.f32.mrb[0].mxu0
        %v755 = vpop.f32.mrb[0].mxu0
        %v756 = vpop.f32.mrb[0].mxu0
        %757 = vdwg.mxu0
        %758 = vmatprep.subr.mxu0 0.0
        %759 = vmatpush1.xpose.msra.mxu0 %v647
        %760 = vmatprep.subr.mxu0 0.0
        %761 = vmatpush1.xpose.msra.mxu0 0.0
        %762 = vmatprep.subr.mxu0 0.0
        %763 = vmatpush1.xpose.msra.mxu0 0.0
        %764 = vmatprep.subr.mxu0 0.0
        %765 = vmatpush1.xpose.msra.mxu0 0.0
        %766 = vmatprep.subr.mxu0 0.0
        %767 = vmatpush1.xpose.msra.mxu0 0.0
        %768 = vmatprep.subr.mxu0 0.0
        %769 = vmatpush1.xpose.msra.mxu0 0.0
        %770 = vmatprep.subr.mxu0 0.0
        %771 = vmatpush1.xpose.msra.mxu0 0.0
        %772 = vmatprep.subr.mxu0 0.0
        %773 = vmatpush1.xpose.msra.mxu0 0.0
        %774 = vmatprep.subr.mxu0 0.0
        %775 = vmatpush1.xpose.msra.mxu0 0.0
        %776 = vmatprep.subr.mxu0 0.0
        %777 = vmatpush1.xpose.msra.mxu0 0.0
        %778 = vmatprep.subr.mxu0 0.0
        %779 = vmatpush1.xpose.msra.mxu0 0.0
        %780 = vmatprep.subr.mxu0 0.0
        %781 = vmatpush1.xpose.msra.mxu0 0.0
        %782 = vmatprep.subr.mxu0 0.0
        %783 = vmatpush1.xpose.msra.mxu0 0.0
        %784 = vmatprep.subr.mxu0 0.0
        %785 = vmatpush1.xpose.msra.mxu0 0.0
        %786 = vmatprep.subr.mxu0 0.0
        %787 = vmatpush1.xpose.msra.mxu0 0.0
        %788 = vmatprep.subr.mxu0 0.0
        %789 = vmatpush1.xpose.msra.mxu0 0.0
        %790 = vmatprep.subr.mxu0 0.0
        %791 = vmatpush1.xpose.msra.mxu0 0.0
        %792 = vmatprep.subr.mxu0 0.0
        %793 = vmatpush1.xpose.msra.mxu0 0.0
        %794 = vmatprep.subr.mxu0 0.0
        %795 = vmatpush1.xpose.msra.mxu0 0.0
        %796 = vmatprep.subr.mxu0 0.0
        %797 = vmatpush1.xpose.msra.mxu0 0.0
        %798 = vmatprep.subr.mxu0 0.0
        %799 = vmatpush1.xpose.msra.mxu0 0.0
        %800 = vmatprep.subr.mxu0 0.0
        %801 = vmatpush1.xpose.msra.mxu0 0.0
        %802 = vmatprep.subr.mxu0 0.0
        %803 = vmatpush1.xpose.msra.mxu0 0.0
        %804 = vmatprep.subr.mxu0 0.0
        %805 = vmatpush1.xpose.msra.mxu0 0.0
        %806 = vmatprep.subr.mxu0 0.0
        %807 = vmatpush1.xpose.msra.mxu0 0.0
        %808 = vmatprep.subr.mxu0 0.0
        %809 = vmatpush1.xpose.msra.mxu0 0.0
        %810 = vmatprep.subr.mxu0 0.0
        %811 = vmatpush1.xpose.msra.mxu0 0.0
        %812 = vmatprep.subr.mxu0 0.0
        %813 = vmatpush1.xpose.msra.mxu0 0.0
        %814 = vmatprep.subr.mxu0 0.0
        %815 = vmatpush1.xpose.msra.mxu0 0.0
        %816 = vmatprep.subr.mxu0 0.0
        %817 = vmatpush1.xpose.msra.mxu0 0.0
        %818 = vmatprep.subr.mxu0 0.0
        %819 = vmatpush1.xpose.msra.mxu0 0.0
        %820 = vmatprep.subr.mxu0 0.0
        %821 = vmatpush1.xpose.msra.mxu0 0.0
        %822 = vmatprep.mubr.f32.mxu0 0.0
        %823 = vmatmul.mubr.f32.gmra.mrb[0].mxu0 %v753
        %v824 = vpop.f32.mrb[0].mxu0
        %v825 = vadd.f32 0.0, %v824
        %v826 = vpop.f32.mrb[0].mxu0
        %827 = vdwg.mxu0
        %v828 = vmul.f32 %v825, 0.088388346
        %vm829 = vcmask 57344
        %v830 = vsel %vm829, %v828, -inf
        %831 = vmax.xlane.f32.xlu0 %v830
        %v832 = vpop.xlane.xlu0 %831
        %v833 = vsub.f32 %v828, %v832
        %v834 = vmul.f32 %v833, 1.442695
        %v835 = vpow.pop %v834
        %v836 = vsel %vm829, %v835, 0.0
        %837 = vadd.xlane.f32.xlu0 %v836
        %v838 = vpop.xlane.xlu0 %837
        %v839 = vrcp.pop %v838
        %v840 = vmul.f32 %v835, %v839
        %vm841 = vcmask 64512
        %v843 = vsel %vm841, %v840, 0
        %845 = vmatprep.subr.mxu0 0.0
        %846 = vmatpush1.msra.mxu0 %v649
        %847 = vmatprep.subr.mxu0 0.0
        %848 = vmatpush1.msra.mxu0 0.0
        %849 = vmatprep.subr.mxu0 0.0
        %850 = vmatpush1.msra.mxu0 0.0
        %851 = vmatprep.subr.mxu0 0.0
        %852 = vmatpush1.msra.mxu0 0.0
        %853 = vmatprep.subr.mxu0 0.0
        %854 = vmatpush1.msra.mxu0 0.0
        %855 = vmatprep.subr.mxu0 0.0
        %856 = vmatpush1.msra.mxu0 0.0
        %857 = vmatprep.subr.mxu0 0.0
        %858 = vmatpush1.msra.mxu0 0.0
        %859 = vmatprep.subr.mxu0 0.0
        %860 = vmatpush1.msra.mxu0 0.0
        %861 = vmatprep.subr.mxu0 0.0
        %862 = vmatpush1.msra.mxu0 0.0
        %863 = vmatprep.subr.mxu0 0.0
        %864 = vmatpush1.msra.mxu0 0.0
        %865 = vmatprep.subr.mxu0 0.0
        %866 = vmatpush1.msra.mxu0 0.0
        %867 = vmatprep.subr.mxu0 0.0
        %868 = vmatpush1.msra.mxu0 0.0
        %869 = vmatprep.subr.mxu0 0.0
        %870 = vmatpush1.msra.mxu0 0.0
        %871 = vmatprep.subr.mxu0 0.0
        %872 = vmatpush1.msra.mxu0 0.0
        %873 = vmatprep.subr.mxu0 0.0
        %874 = vmatpush1.msra.mxu0 0.0
        %875 = vmatprep.subr.mxu0 0.0
        %876 = vmatpush1.msra.mxu0 0.0
        %877 = vmatprep.subr.mxu0 0.0
        %878 = vmatpush1.msra.mxu0 0.0
        %879 = vmatprep.subr.mxu0 0.0
        %880 = vmatpush1.msra.mxu0 0.0
        %881 = vmatprep.subr.mxu0 0.0
        %882 = vmatpush1.msra.mxu0 0.0
        %883 = vmatprep.subr.mxu0 0.0
        %884 = vmatpush1.msra.mxu0 0.0
        %885 = vmatprep.subr.mxu0 0.0
        %886 = vmatpush1.msra.mxu0 0.0
        %887 = vmatprep.subr.mxu0 0.0
        %888 = vmatpush1.msra.mxu0 0.0
        %889 = vmatprep.subr.mxu0 0.0
        %890 = vmatpush1.msra.mxu0 0.0
        %891 = vmatprep.subr.mxu0 0.0
        %892 = vmatpush1.msra.mxu0 0.0
        %893 = vmatprep.subr.mxu0 0.0
        %894 = vmatpush1.msra.mxu0 0.0
        %895 = vmatprep.subr.mxu0 0.0
        %896 = vmatpush1.msra.mxu0 0.0
        %897 = vmatprep.subr.mxu0 0.0
        %898 = vmatpush1.msra.mxu0 0.0
        %899 = vmatprep.subr.mxu0 0.0
        %900 = vmatpush1.msra.mxu0 0.0
        %901 = vmatprep.subr.mxu0 0.0
        %902 = vmatpush1.msra.mxu0 0.0
        %903 = vmatprep.subr.mxu0 0.0
        %904 = vmatpush1.msra.mxu0 0.0
        %905 = vmatprep.subr.mxu0 0.0
        %906 = vmatpush1.msra.mxu0 0.0
        %907 = vmatprep.subr.mxu0 0.0
        %908 = vmatpush1.msra.mxu0 0.0
        %909 = vmatprep.mubr.f32.mxu0 0.0
        %910 = vmatmul.mubr.f32.gmra.mrb[0].mxu0 %v843
        %v911 = vpop.f32.mrb[0].mxu0
        %v912 = vadd.f32 0.0, %v911
        %v913 = vpop.f32.mrb[0].mxu0
        %914 = vdwg.mxu0
        %v915 = vpack.c.bf16 %v912, %v912
        %v916 = vld [vmem:[#allocation7] sm:$0xf]
        %v917 = vld [vmem:[#allocation7 + $0x4] sm:$0xf]
        %v918 = vld [vmem:[#allocation7 + $0x8] sm:$0xf]
        %v919 = vld [vmem:[#allocation7 + $0xc] sm:$0xf]
        %v920 = vld [vmem:[#allocation7 + $0x10] sm:$0xf]
        %v921 = vld [vmem:[#allocation7 + $0x14] sm:$0xf]
        %v922 = vld [vmem:[#allocation7 + $0x18] sm:$0xf]
        %v923 = vld [vmem:[#allocation7 + $0x1c] sm:$0xf]
        %v924 = vld [vmem:[#allocation7 + $0x20] sm:$0xf]
        %v925 = vld [vmem:[#allocation7 + $0x24] sm:$0xf]
        %v926 = vld [vmem:[#allocation7 + $0x28] sm:$0xf]
        %v927 = vld [vmem:[#allocation7 + $0x2c] sm:$0xf]
        %v928 = vld [vmem:[#allocation7 + $0x30] sm:$0xf]
        %v929 = vld [vmem:[#allocation7 + $0x34] sm:$0xf]
        %v930 = vld [vmem:[#allocation7 + $0x38] sm:$0xf]
        %v931 = vld [vmem:[#allocation7 + $0x3c] sm:$0xf]
        %v932 = vld [vmem:[%s7] sm:$0x1]
        %v949 = vunpack.c.l.b16 %v916
        %v950 = vunpack.c.l.b16 %v917
        %v951 = vunpack.c.l.b16 %v918
        %v952 = vunpack.c.l.b16 %v919
        %v953 = vunpack.c.l.b16 %v920
        %v954 = vunpack.c.l.b16 %v921
        %v955 = vunpack.c.l.b16 %v922
        %v956 = vunpack.c.l.b16 %v923
        %v957 = vunpack.c.l.b16 %v924
        %v958 = vunpack.c.l.b16 %v925
        %v959 = vunpack.c.l.b16 %v926
        %v960 = vunpack.c.l.b16 %v927
        %v961 = vunpack.c.l.b16 %v928
        %v962 = vunpack.c.l.b16 %v929
        %v963 = vunpack.c.l.b16 %v930
        %v964 = vunpack.c.l.b16 %v931
        %v965 = vpack.c.b16 %v950, %v949
        %v966 = vpack.c.b16 %v952, %v951
        %v967 = vpack.c.b16 %v954, %v953
        %v968 = vpack.c.b16 %v956, %v955
        %v969 = vpack.c.b16 %v958, %v957
        %v970 = vpack.c.b16 %v960, %v959
        %v971 = vpack.c.b16 %v962, %v961
        %v972 = vpack.c.b16 %v964, %v963
        %981 = vmatprep.subr.bf16.mxu0 0
        %982 = vmatpush1.bf16.msra.mxu0 %v965
        %983 = vmatprep.subr.bf16.mxu0 0
        %984 = vmatpush1.bf16.msra.mxu0 %v966
        %985 = vmatprep.subr.bf16.mxu0 0
        %986 = vmatpush1.bf16.msra.mxu0 %v967
        %987 = vmatprep.subr.bf16.mxu0 0
        %988 = vmatpush1.bf16.msra.mxu0 %v968
        %989 = vmatprep.subr.bf16.mxu0 0
        %990 = vmatpush1.bf16.msra.mxu0 %v969
        %991 = vmatprep.subr.bf16.mxu0 0
        %992 = vmatpush1.bf16.msra.mxu0 %v970
        %993 = vmatprep.subr.bf16.mxu0 0
        %994 = vmatpush1.bf16.msra.mxu0 %v971
        %995 = vmatprep.subr.bf16.mxu0 0
        %996 = vmatpush1.bf16.msra.mxu0 %v972
        %997 = vmatprep.subr.bf16.mxu0 0
        %998 = vmatpush1.bf16.msra.mxu0 0
        %999 = vmatprep.subr.bf16.mxu0 0
        %1000 = vmatpush1.bf16.msra.mxu0 0
        %1001 = vmatprep.subr.bf16.mxu0 0
        %1002 = vmatpush1.bf16.msra.mxu0 0
        %1003 = vmatprep.subr.bf16.mxu0 0
        %1004 = vmatpush1.bf16.msra.mxu0 0
        %1005 = vmatprep.subr.bf16.mxu0 0
        %1006 = vmatpush1.bf16.msra.mxu0 0
        %1007 = vmatprep.subr.bf16.mxu0 0
        %1008 = vmatpush1.bf16.msra.mxu0 0
        %1009 = vmatprep.subr.bf16.mxu0 0
        %1010 = vmatpush1.bf16.msra.mxu0 0
        %1011 = vmatprep.subr.bf16.mxu0 0
        %1012 = vmatpush1.bf16.msra.mxu0 0
        %1013 = vmatprep.mubr.bf16.mxu0 0
        %1014 = vmatmul.mubr.bf16.gmra.mrb[0].mxu0 %v915
        %v1015 = vpop.f32.mrb[0].mxu0
        %v1016 = vadd.f32 %v932, %v1015
        %v1017 = vpop.f32.mrb[0].mxu0
        %v1018 = vpop.f32.mrb[0].mxu0
        %v1019 = vpop.f32.mrb[0].mxu0
        %1020 = vdwg.mxu0
        %v1021 = vld [vmem:[%s8] sm:$0xff]
        %v1022 = vld [vmem:[%s8 + $0x8] sm:$0xff]
        %v1023 = vld [vmem:[%s8 + $0x10] sm:$0xff]
        %v1024 = vld [vmem:[%s8 + $0x18] sm:$0xff]
        %v1025 = vld [vmem:[%s8 + $0x20] sm:$0xff]
        %v1026 = vld [vmem:[%s8 + $0x28] sm:$0xff]
        %v1027 = vld [vmem:[%s8 + $0x30] sm:$0xff]
        %v1028 = vld [vmem:[%s8 + $0x38] sm:$0xff]
        %v1029 = vld [vmem:[%s8 + $0x40] sm:$0xff]
        %v1030 = vld [vmem:[%s8 + $0x48] sm:$0xff]
        %v1031 = vld [vmem:[%s8 + $0x50] sm:$0xff]
        %v1032 = vld [vmem:[%s8 + $0x58] sm:$0xff]
        %v1033 = vld [vmem:[%s8 + $0x60] sm:$0xff]
        %v1034 = vld [vmem:[%s8 + $0x68] sm:$0xff]
        %v1035 = vld [vmem:[%s8 + $0x70] sm:$0xff]
        %v1036 = vld [vmem:[%s8 + $0x78] sm:$0xff]
        %v1037 = vld [vmem:[%s9] sm:$0x3]
        %v1039 = vlaneseq
        %v1040 = vshrl.u32 %v1039, 7
        %v1041 = vsub.s32 0, %v1040
        %v1042 = vrot.slane %v1037, %v1041
        %v1043 = vlaneseq
        %v1044 = vshrl.u32 %v1043, 7
        %v1045 = vsub.s32 1, %v1044
        %v1046 = vrot.slane %v1037, %v1045
        %v1065 = vunpack.c.l.b16 %v1021
        %v1066 = vunpack.c.h.b16 %v1021
        %v1067 = vunpack.c.l.b16 %v1022
        %v1068 = vunpack.c.h.b16 %v1022
        %v1069 = vunpack.c.l.b16 %v1023
        %v1070 = vunpack.c.h.b16 %v1023
        %v1071 = vunpack.c.l.b16 %v1024
        %v1072 = vunpack.c.h.b16 %v1024
        %v1073 = vunpack.c.l.b16 %v1025
        %v1074 = vunpack.c.h.b16 %v1025
        %v1075 = vunpack.c.l.b16 %v1026
        %v1076 = vunpack.c.h.b16 %v1026
        %v1077 = vunpack.c.l.b16 %v1027
        %v1078 = vunpack.c.h.b16 %v1027
        %v1079 = vunpack.c.l.b16 %v1028
        %v1080 = vunpack.c.h.b16 %v1028
        %v1081 = vunpack.c.l.b16 %v1029
        %v1082 = vunpack.c.h.b16 %v1029
        %v1083 = vunpack.c.l.b16 %v1030
        %v1084 = vunpack.c.h.b16 %v1030
        %v1085 = vunpack.c.l.b16 %v1031
        %v1086 = vunpack.c.h.b16 %v1031
        %v1087 = vunpack.c.l.b16 %v1032
        %v1088 = vunpack.c.h.b16 %v1032
        %v1089 = vunpack.c.l.b16 %v1033
        %v1090 = vunpack.c.h.b16 %v1033
        %v1091 = vunpack.c.l.b16 %v1034
        %v1092 = vunpack.c.h.b16 %v1034
        %v1093 = vunpack.c.l.b16 %v1035
        %v1094 = vunpack.c.h.b16 %v1035
        %v1095 = vunpack.c.l.b16 %v1036
        %v1096 = vunpack.c.h.b16 %v1036
        %v1097 = vpack.c.b16 %v1067, %v1065
        %v1098 = vpack.c.b16 %v1068, %v1066
        %v1099 = vpack.c.b16 %v1071, %v1069
        %v1100 = vpack.c.b16 %v1072, %v1070
        %v1101 = vpack.c.b16 %v1075, %v1073
        %v1102 = vpack.c.b16 %v1076, %v1074
        %v1103 = vpack.c.b16 %v1079, %v1077
        %v1104 = vpack.c.b16 %v1080, %v1078
        %v1105 = vpack.c.b16 %v1083, %v1081
        %v1106 = vpack.c.b16 %v1084, %v1082
        %v1107 = vpack.c.b16 %v1087, %v1085
        %v1108 = vpack.c.b16 %v1088, %v1086
        %v1109 = vpack.c.b16 %v1091, %v1089
        %v1110 = vpack.c.b16 %v1092, %v1090
        %v1111 = vpack.c.b16 %v1095, %v1093
        %v1112 = vpack.c.b16 %v1096, %v1094
        %1129 = vmatprep.subr.bf16.mxu0 %v1098
        %1130 = vmatpush1.bf16.msra.mxu0 %v1097
        %1131 = vmatprep.subr.bf16.mxu0 %v1100
        %1132 = vmatpush1.bf16.msra.mxu0 %v1099
        %1133 = vmatprep.subr.bf16.mxu0 %v1102
        %1134 = vmatpush1.bf16.msra.mxu0 %v1101
        %1135 = vmatprep.subr.bf16.mxu0 %v1104
        %1136 = vmatpush1.bf16.msra.mxu0 %v1103
        %1137 = vmatprep.subr.bf16.mxu0 %v1106
        %1138 = vmatpush1.bf16.msra.mxu0 %v1105
        %1139 = vmatprep.subr.bf16.mxu0 %v1108
        %1140 = vmatpush1.bf16.msra.mxu0 %v1107
        %1141 = vmatprep.subr.bf16.mxu0 %v1110
        %1142 = vmatpush1.bf16.msra.mxu0 %v1109
        %1143 = vmatprep.subr.bf16.mxu0 %v1112
        %1144 = vmatpush1.bf16.msra.mxu0 %v1111
        %1145 = vmatprep.subr.bf16.mxu0 0
        %1146 = vmatpush1.bf16.msra.mxu0 0
        %1147 = vmatprep.subr.bf16.mxu0 0
        %1148 = vmatpush1.bf16.msra.mxu0 0
        %1149 = vmatprep.subr.bf16.mxu0 0
        %1150 = vmatpush1.bf16.msra.mxu0 0
        %1151 = vmatprep.subr.bf16.mxu0 0
        %1152 = vmatpush1.bf16.msra.mxu0 0
        %1153 = vmatprep.subr.bf16.mxu0 0
        %1154 = vmatpush1.bf16.msra.mxu0 0
        %1155 = vmatprep.subr.bf16.mxu0 0
        %1156 = vmatpush1.bf16.msra.mxu0 0
        %1157 = vmatprep.subr.bf16.mxu0 0
        %1158 = vmatpush1.bf16.msra.mxu0 0
        %1159 = vmatprep.subr.bf16.mxu0 0
        %1160 = vmatpush1.bf16.msra.mxu0 0
        %1161 = vmatprep.mubr.bf16.mxu0 0
        %1162 = vmatmul.mubr.bf16.gmra.mrb[0].mxu0 %v503
        %v1163 = vpop.f32.mrb[0].mxu0
        %v1164 = vadd.f32 %v1042, %v1163
        %v1165 = vpop.f32.mrb[0].mxu0
        %v1166 = vadd.f32 %v1046, %v1165
        %v1167 = vpop.f32.mrb[0].mxu0
        %v1168 = vpop.f32.mrb[0].mxu0
        %1169 = vdwg.mxu0
        %1170 = vmatprep.subr.mxu0 0.0
        %1171 = vmatpush1.xpose.msra.mxu0 %v1164
        %1172 = vmatprep.subr.mxu0 0.0
        %1173 = vmatpush1.xpose.msra.mxu0 0.0
        %1174 = vmatprep.subr.mxu0 0.0
        %1175 = vmatpush1.xpose.msra.mxu0 0.0
        %1176 = vmatprep.subr.mxu0 0.0
        %1177 = vmatpush1.xpose.msra.mxu0 0.0
        %1178 = vmatprep.subr.mxu0 0.0
        %1179 = vmatpush1.xpose.msra.mxu0 0.0
        %1180 = vmatprep.subr.mxu0 0.0
        %1181 = vmatpush1.xpose.msra.mxu0 0.0
        %1182 = vmatprep.subr.mxu0 0.0
        %1183 = vmatpush1.xpose.msra.mxu0 0.0
        %1184 = vmatprep.subr.mxu0 0.0
        %1185 = vmatpush1.xpose.msra.mxu0 0.0
        %1186 = vmatprep.subr.mxu0 0.0
        %1187 = vmatpush1.xpose.msra.mxu0 0.0
        %1188 = vmatprep.subr.mxu0 0.0
        %1189 = vmatpush1.xpose.msra.mxu0 0.0
        %1190 = vmatprep.subr.mxu0 0.0
        %1191 = vmatpush1.xpose.msra.mxu0 0.0
        %1192 = vmatprep.subr.mxu0 0.0
        %1193 = vmatpush1.xpose.msra.mxu0 0.0
        %1194 = vmatprep.subr.mxu0 0.0
        %1195 = vmatpush1.xpose.msra.mxu0 0.0
        %1196 = vmatprep.subr.mxu0 0.0
        %1197 = vmatpush1.xpose.msra.mxu0 0.0
        %1198 = vmatprep.subr.mxu0 0.0
        %1199 = vmatpush1.xpose.msra.mxu0 0.0
        %1200 = vmatprep.subr.mxu0 0.0
        %1201 = vmatpush1.xpose.msra.mxu0 0.0
        %1202 = vmatprep.subr.mxu0 0.0
        %1203 = vmatpush1.xpose.msra.mxu0 0.0
        %1204 = vmatprep.subr.mxu0 0.0
        %1205 = vmatpush1.xpose.msra.mxu0 0.0
        %1206 = vmatprep.subr.mxu0 0.0
        %1207 = vmatpush1.xpose.msra.mxu0 0.0
        %1208 = vmatprep.subr.mxu0 0.0
        %1209 = vmatpush1.xpose.msra.mxu0 0.0
        %1210 = vmatprep.subr.mxu0 0.0
        %1211 = vmatpush1.xpose.msra.mxu0 0.0
        %1212 = vmatprep.subr.mxu0 0.0
        %1213 = vmatpush1.xpose.msra.mxu0 0.0
        %1214 = vmatprep.subr.mxu0 0.0
        %1215 = vmatpush1.xpose.msra.mxu0 0.0
        %1216 = vmatprep.subr.mxu0 0.0
        %1217 = vmatpush1.xpose.msra.mxu0 0.0
        %1218 = vmatprep.subr.mxu0 0.0
        %1219 = vmatpush1.xpose.msra.mxu0 0.0
        %1220 = vmatprep.subr.mxu0 0.0
        %1221 = vmatpush1.xpose.msra.mxu0 0.0
        %1222 = vmatprep.subr.mxu0 0.0
        %1223 = vmatpush1.xpose.msra.mxu0 0.0
        %1224 = vmatprep.subr.mxu0 0.0
        %1225 = vmatpush1.xpose.msra.mxu0 0.0
        %1226 = vmatprep.subr.mxu0 0.0
        %1227 = vmatpush1.xpose.msra.mxu0 0.0
        %1228 = vmatprep.subr.mxu0 0.0
        %1229 = vmatpush1.xpose.msra.mxu0 0.0
        %1230 = vmatprep.subr.mxu0 0.0
        %1231 = vmatpush1.xpose.msra.mxu0 0.0
        %1232 = vmatprep.subr.mxu0 0.0
        %1233 = vmatpush1.xpose.msra.mxu0 0.0
        %1234 = vmatprep.mubr.f32.mxu0 0.0
        %1235 = vmatmul.mubr.f32.gmra.mrb[0].mxu0 %v1016
        %v1236 = vpop.f32.mrb[0].mxu0
        %v1237 = vadd.f32 0.0, %v1236
        %v1238 = vpop.f32.mrb[0].mxu0
        %1239 = vdwg.mxu0
        %v1240 = vmul.f32 %v1237, 0.088388346
        %v1241 = vsel %vm829, %v1240, -inf
        %1242 = vmax.xlane.f32.xlu0 %v1241
        %v1243 = vpop.xlane.xlu0 %1242
        %v1244 = vsub.f32 %v1240, %v1243
        %v1245 = vmul.f32 %v1244, 1.442695
        %v1246 = vpow.pop %v1245
        %v1247 = vsel %vm829, %v1246, 0.0
        %1248 = vadd.xlane.f32.xlu0 %v1247
        %v1249 = vpop.xlane.xlu0 %1248
        %v1250 = vrcp.pop %v1249
        %v1251 = vmul.f32 %v1246, %v1250
        %v1253 = vsel %vm841, %v1251, 0
        %1255 = vmatprep.subr.mxu0 0.0
        %1256 = vmatpush1.msra.mxu0 %v1166
        %1257 = vmatprep.subr.mxu0 0.0
        %1258 = vmatpush1.msra.mxu0 0.0
        %1259 = vmatprep.subr.mxu0 0.0
        %1260 = vmatpush1.msra.mxu0 0.0
        %1261 = vmatprep.subr.mxu0 0.0
        %1262 = vmatpush1.msra.mxu0 0.0
        %1263 = vmatprep.subr.mxu0 0.0
        %1264 = vmatpush1.msra.mxu0 0.0
        %1265 = vmatprep.subr.mxu0 0.0
        %1266 = vmatpush1.msra.mxu0 0.0
        %1267 = vmatprep.subr.mxu0 0.0
        %1268 = vmatpush1.msra.mxu0 0.0
        %1269 = vmatprep.subr.mxu0 0.0
        %1270 = vmatpush1.msra.mxu0 0.0
        %1271 = vmatprep.subr.mxu0 0.0
        %1272 = vmatpush1.msra.mxu0 0.0
        %1273 = vmatprep.subr.mxu0 0.0
        %1274 = vmatpush1.msra.mxu0 0.0
        %1275 = vmatprep.subr.mxu0 0.0
        %1276 = vmatpush1.msra.mxu0 0.0
        %1277 = vmatprep.subr.mxu0 0.0
        %1278 = vmatpush1.msra.mxu0 0.0
        %1279 = vmatprep.subr.mxu0 0.0
        %1280 = vmatpush1.msra.mxu0 0.0
        %1281 = vmatprep.subr.mxu0 0.0
        %1282 = vmatpush1.msra.mxu0 0.0
        %1283 = vmatprep.subr.mxu0 0.0
        %1284 = vmatpush1.msra.mxu0 0.0
        %1285 = vmatprep.subr.mxu0 0.0
        %1286 = vmatpush1.msra.mxu0 0.0
        %1287 = vmatprep.subr.mxu0 0.0
        %1288 = vmatpush1.msra.mxu0 0.0
        %1289 = vmatprep.subr.mxu0 0.0
        %1290 = vmatpush1.msra.mxu0 0.0
        %1291 = vmatprep.subr.mxu0 0.0
        %1292 = vmatpush1.msra.mxu0 0.0
        %1293 = vmatprep.subr.mxu0 0.0
        %1294 = vmatpush1.msra.mxu0 0.0
        %1295 = vmatprep.subr.mxu0 0.0
        %1296 = vmatpush1.msra.mxu0 0.0
        %1297 = vmatprep.subr.mxu0 0.0
        %1298 = vmatpush1.msra.mxu0 0.0
        %1299 = vmatprep.subr.mxu0 0.0
        %1300 = vmatpush1.msra.mxu0 0.0
        %1301 = vmatprep.subr.mxu0 0.0
        %1302 = vmatpush1.msra.mxu0 0.0
        %1303 = vmatprep.subr.mxu0 0.0
        %1304 = vmatpush1.msra.mxu0 0.0
        %1305 = vmatprep.subr.mxu0 0.0
        %1306 = vmatpush1.msra.mxu0 0.0
        %1307 = vmatprep.subr.mxu0 0.0
        %1308 = vmatpush1.msra.mxu0 0.0
        %1309 = vmatprep.subr.mxu0 0.0
        %1310 = vmatpush1.msra.mxu0 0.0
        %1311 = vmatprep.subr.mxu0 0.0
        %1312 = vmatpush1.msra.mxu0 0.0
        %1313 = vmatprep.subr.mxu0 0.0
        %1314 = vmatpush1.msra.mxu0 0.0
        %1315 = vmatprep.subr.mxu0 0.0
        %1316 = vmatpush1.msra.mxu0 0.0
        %1317 = vmatprep.subr.mxu0 0.0
        %1318 = vmatpush1.msra.mxu0 0.0
        %1319 = vmatprep.mubr.f32.mxu0 0.0
        %1320 = vmatmul.mubr.f32.gmra.mrb[0].mxu0 %v1253
        %v1321 = vpop.f32.mrb[0].mxu0
        %v1322 = vadd.f32 0.0, %v1321
        %v1323 = vpop.f32.mrb[0].mxu0
        %1324 = vdwg.mxu0
        %v1325 = vld [vmem:[%s10] sm:$0xff]
        %v1326 = vld [vmem:[%s10 + $0x8] sm:$0xff]
        %v1327 = vld [vmem:[%s10 + $0x10] sm:$0xff]
        %v1328 = vld [vmem:[%s10 + $0x18] sm:$0xff]
        %v1329 = vld [vmem:[%s10 + $0x20] sm:$0xff]
        %v1330 = vld [vmem:[%s10 + $0x28] sm:$0xff]
        %v1331 = vld [vmem:[%s10 + $0x30] sm:$0xff]
        %v1332 = vld [vmem:[%s10 + $0x38] sm:$0xff]
        %v1333 = vld [vmem:[%s10 + $0x40] sm:$0xff]
        %v1334 = vld [vmem:[%s10 + $0x48] sm:$0xff]
        %v1335 = vld [vmem:[%s10 + $0x50] sm:$0xff]
        %v1336 = vld [vmem:[%s10 + $0x58] sm:$0xff]
        %v1337 = vld [vmem:[%s10 + $0x60] sm:$0xff]
        %v1338 = vld [vmem:[%s10 + $0x68] sm:$0xff]
        %v1339 = vld [vmem:[%s10 + $0x70] sm:$0xff]
        %v1340 = vld [vmem:[%s10 + $0x78] sm:$0xff]
        %v1341 = vld [vmem:[%s11] sm:$0xff]
        %v1342 = vld [vmem:[%s11 + $0x8] sm:$0xff]
        %v1343 = vld [vmem:[%s11 + $0x10] sm:$0xff]
        %v1344 = vld [vmem:[%s11 + $0x18] sm:$0xff]
        %v1345 = vld [vmem:[%s11 + $0x20] sm:$0xff]
        %v1346 = vld [vmem:[%s11 + $0x28] sm:$0xff]
        %v1347 = vld [vmem:[%s11 + $0x30] sm:$0xff]
        %v1348 = vld [vmem:[%s11 + $0x38] sm:$0xff]
        %v1349 = vld [vmem:[%s11 + $0x40] sm:$0xff]
        %v1350 = vld [vmem:[%s11 + $0x48] sm:$0xff]
        %v1351 = vld [vmem:[%s11 + $0x50] sm:$0xff]
        %v1352 = vld [vmem:[%s11 + $0x58] sm:$0xff]
        %v1353 = vld [vmem:[%s11 + $0x60] sm:$0xff]
        %v1354 = vld [vmem:[%s11 + $0x68] sm:$0xff]
        %v1355 = vld [vmem:[%s11 + $0x70] sm:$0xff]
        %v1356 = vld [vmem:[%s11 + $0x78] sm:$0xff]
        %1357 = vmatprep.subr.mxu0 0.0
        %1358 = vmatpush1.msra.mxu0 %v1341
        %1359 = vmatprep.subr.mxu0 0.0
        %1360 = vmatpush1.msra.mxu0 %v1342
        %1361 = vmatprep.subr.mxu0 0.0
        %1362 = vmatpush1.msra.mxu0 %v1343
        %1363 = vmatprep.subr.mxu0 0.0
        %1364 = vmatpush1.msra.mxu0 %v1344
        %1365 = vmatprep.subr.mxu0 0.0
        %1366 = vmatpush1.msra.mxu0 %v1345
        %1367 = vmatprep.subr.mxu0 0.0
        %1368 = vmatpush1.msra.mxu0 %v1346
        %1369 = vmatprep.subr.mxu0 0.0
        %1370 = vmatpush1.msra.mxu0 %v1347
        %1371 = vmatprep.subr.mxu0 0.0
        %1372 = vmatpush1.msra.mxu0 %v1348
        %1373 = vmatprep.subr.mxu0 0.0
        %1374 = vmatpush1.msra.mxu0 %v1349
        %1375 = vmatprep.subr.mxu0 0.0
        %1376 = vmatpush1.msra.mxu0 %v1350
        %1377 = vmatprep.subr.mxu0 0.0
        %1378 = vmatpush1.msra.mxu0 %v1351
        %1379 = vmatprep.subr.mxu0 0.0
        %1380 = vmatpush1.msra.mxu0 %v1352
        %1381 = vmatprep.subr.mxu0 0.0
        %1382 = vmatpush1.msra.mxu0 %v1353
        %1383 = vmatprep.subr.mxu0 0.0
        %1384 = vmatpush1.msra.mxu0 %v1354
        %1385 = vmatprep.subr.mxu0 0.0
        %1386 = vmatpush1.msra.mxu0 %v1355
        %1387 = vmatprep.subr.mxu0 0.0
        %1388 = vmatpush1.msra.mxu0 %v1356
        %1389 = vmatprep.subr.mxu0 0.0
        %1390 = vmatpush1.msra.mxu0 0.0
        %1391 = vmatprep.subr.mxu0 0.0
        %1392 = vmatpush1.msra.mxu0 0.0
        %1393 = vmatprep.subr.mxu0 0.0
        %1394 = vmatpush1.msra.mxu0 0.0
        %1395 = vmatprep.subr.mxu0 0.0
        %1396 = vmatpush1.msra.mxu0 0.0
        %1397 = vmatprep.subr.mxu0 0.0
        %1398 = vmatpush1.msra.mxu0 0.0
        %1399 = vmatprep.subr.mxu0 0.0
        %1400 = vmatpush1.msra.mxu0 0.0
        %1401 = vmatprep.subr.mxu0 0.0
        %1402 = vmatpush1.msra.mxu0 0.0
        %1403 = vmatprep.subr.mxu0 0.0
        %1404 = vmatpush1.msra.mxu0 0.0
        %1405 = vmatprep.subr.mxu0 0.0
        %1406 = vmatpush1.msra.mxu0 0.0
        %1407 = vmatprep.subr.mxu0 0.0
        %1408 = vmatpush1.msra.mxu0 0.0
        %1409 = vmatprep.subr.mxu0 0.0
        %1410 = vmatpush1.msra.mxu0 0.0
        %1411 = vmatprep.subr.mxu0 0.0
        %1412 = vmatpush1.msra.mxu0 0.0
        %1413 = vmatprep.subr.mxu0 0.0
        %1414 = vmatpush1.msra.mxu0 0.0
        %1415 = vmatprep.subr.mxu0 0.0
        %1416 = vmatpush1.msra.mxu0 0.0
        %1417 = vmatprep.subr.mxu0 0.0
        %1418 = vmatpush1.msra.mxu0 0.0
        %1419 = vmatprep.subr.mxu0 0.0
        %1420 = vmatpush1.msra.mxu0 0.0
        %1421 = vmatprep.mubr.f32.mxu0 0.0
        %1422 = vmatmul.mubr.f32.gmra.mrb[0].mxu0 %v1322
        %v1423 = vpop.f32.mrb[0].mxu0
        %v1424 = vadd.f32 0.0, %v1423
        %v1425 = vpop.f32.mrb[0].mxu0
        %1426 = vdwg.mxu0
        %1427 = vmatprep.subr.mxu0 0.0
        %1428 = vmatpush1.msra.mxu0 %v1325
        %1429 = vmatprep.subr.mxu0 0.0
        %1430 = vmatpush1.msra.mxu0 %v1326
        %1431 = vmatprep.subr.mxu0 0.0
        %1432 = vmatpush1.msra.mxu0 %v1327
        %1433 = vmatprep.subr.mxu0 0.0
        %1434 = vmatpush1.msra.mxu0 %v1328
        %1435 = vmatprep.subr.mxu0 0.0
        %1436 = vmatpush1.msra.mxu0 %v1329
        %1437 = vmatprep.subr.mxu0 0.0
        %1438 = vmatpush1.msra.mxu0 %v1330
        %1439 = vmatprep.subr.mxu0 0.0
        %1440 = vmatpush1.msra.mxu0 %v1331
        %1441 = vmatprep.subr.mxu0 0.0
        %1442 = vmatpush1.msra.mxu0 %v1332
        %1443 = vmatprep.subr.mxu0 0.0
        %1444 = vmatpush1.msra.mxu0 %v1333
        %1445 = vmatprep.subr.mxu0 0.0
        %1446 = vmatpush1.msra.mxu0 %v1334
        %1447 = vmatprep.subr.mxu0 0.0
        %1448 = vmatpush1.msra.mxu0 %v1335
        %1449 = vmatprep.subr.mxu0 0.0
        %1450 = vmatpush1.msra.mxu0 %v1336
        %1451 = vmatprep.subr.mxu0 0.0
        %1452 = vmatpush1.msra.mxu0 %v1337
        %1453 = vmatprep.subr.mxu0 0.0
        %1454 = vmatpush1.msra.mxu0 %v1338
        %1455 = vmatprep.subr.mxu0 0.0
        %1456 = vmatpush1.msra.mxu0 %v1339
        %1457 = vmatprep.subr.mxu0 0.0
        %1458 = vmatpush1.msra.mxu0 %v1340
        %1459 = vmatprep.subr.mxu0 0.0
        %1460 = vmatpush1.msra.mxu0 0.0
        %1461 = vmatprep.subr.mxu0 0.0
        %1462 = vmatpush1.msra.mxu0 0.0
        %1463 = vmatprep.subr.mxu0 0.0
        %1464 = vmatpush1.msra.mxu0 0.0
        %1465 = vmatprep.subr.mxu0 0.0
        %1466 = vmatpush1.msra.mxu0 0.0
        %1467 = vmatprep.subr.mxu0 0.0
        %1468 = vmatpush1.msra.mxu0 0.0
        %1469 = vmatprep.subr.mxu0 0.0
        %1470 = vmatpush1.msra.mxu0 0.0
        %1471 = vmatprep.subr.mxu0 0.0
        %1472 = vmatpush1.msra.mxu0 0.0
        %1473 = vmatprep.subr.mxu0 0.0
        %1474 = vmatpush1.msra.mxu0 0.0
        %1475 = vmatprep.subr.mxu0 0.0
        %1476 = vmatpush1.msra.mxu0 0.0
        %1477 = vmatprep.subr.mxu0 0.0
        %1478 = vmatpush1.msra.mxu0 0.0
        %1479 = vmatprep.subr.mxu0 0.0
        %1480 = vmatpush1.msra.mxu0 0.0
        %1481 = vmatprep.subr.mxu0 0.0
        %1482 = vmatpush1.msra.mxu0 0.0
        %1483 = vmatprep.subr.mxu0 0.0
        %1484 = vmatpush1.msra.mxu0 0.0
        %1485 = vmatprep.subr.mxu0 0.0
        %1486 = vmatpush1.msra.mxu0 0.0
        %1487 = vmatprep.subr.mxu0 0.0
        %1488 = vmatpush1.msra.mxu0 0.0
        %1489 = vmatprep.subr.mxu0 0.0
        %1490 = vmatpush1.msra.mxu0 0.0
        %1491 = vmatprep.mubr.f32.mxu0 0.0
        %1492 = vmatmul.mubr.f32.gmra.mrb[0].mxu0 %v912
        %v1493 = vpop.f32.mrb[0].mxu0
        %v1494 = vadd.f32 %v1424, %v1493
        %v1495 = vpop.f32.mrb[0].mxu0
        %1496 = vdwg.mxu0
        %v1497 = vld [vmem:[%s12] sm:$0x1]
        %v1498 = vadd.f32 %v1494, %v1497
        %vm1499 = vcmask 24576
        %1500 = vst.msk [vmem:[%s496] sm:$0x1] %vm1499, %v1498
        %s1501 = sand.u32 %s322, 1
        %s1502 = scalar_lea.sflag [#allocation4], %s1501
        %s1503 = sand.u32 %s322, 1
        %s1504 = scalar_lea.vmem [#allocation8], %s1503
        // Predicated region
        $region85: #{tpu_custom_call.1} parent=71 // pred_check
          %p1505 = pneg %p332
        $region86: #{tpu_custom_call.1} parent=71 // pred_check_branch
          %1507 = sbr.rel (%p1505) target = $region88
        $region87: #{tpu_custom_call.1} parent=71 // pred_region
          %s1509 = ssub.s32 16, 16
          %1510 = vsyncadd %s1502, %s1509
          %s1511 = smul.addr %s31, 16
          %s1512 = scalar_lea.hbm %s13, %s1511
          %s1514 = sshll.u32 %s1504, 4
          %s1515 = int_to_ptr.vmem [resolvable:$true] %s1514
          %1517 = dma.vmem_to_hbm [thread:$0]  %s1515, 16, %s1512, %s1502
        $region88: #{tpu_custom_call.1} parent=71 // pred_fallthru
          _
      $region72: #{tpu_custom_call.1} parent=5 // pred_fallthru
        _
      %p1518 = scmp.le.s32.totalorder 2, %s26
      // Predicated region
      $region89: #{tpu_custom_call.1} parent=5 // pred_check
        %p1519 = pneg %p1518
      $region90: #{tpu_custom_call.1} parent=5 // pred_check_branch
        %1521 = sbr.rel (%p1519) target = $region92
      $region91: #{tpu_custom_call.1} parent=5 // pred_region
        %s1522 = ssub.s32 %s26, 2
        // Predicated region
        $region93: #{tpu_custom_call.1} parent=91 // pred_check
          %p1523 = pneg %p338
        $region94: #{tpu_custom_call.1} parent=91 // pred_check_branch
          %1525 = sbr.rel (%p1523) target = $region96
        $region95: #{tpu_custom_call.1} parent=91 // pred_region
          %s1526 = sand.u32 %s323, 1
          %s1527 = scalar_lea.sflag [#allocation4], %s1526
          %s1528 = sand.u32 %s323, 1
          %s1529 = scalar_lea.vmem [#allocation8], %s1528
          %1530 = dma.done %s1527, 16
        $region96: #{tpu_custom_call.1} parent=91 // pred_fallthru
          _
      $region92: #{tpu_custom_call.1} parent=5 // pred_fallthru
        _
    $region6: #{tpu_custom_call.1} parent=1 // loop_footer
      %s30 = sadd.s32 1, %s26
    $region7: #{tpu_custom_call.1} parent=1 // loop_footer_branch
      %25 = sbr.rel target = $region3
    $region8: #{tpu_custom_call.1} parent=1 // loop_exit
      _
    %1531 = vsyncpa [#allocation3], 1
    %s1532 = scalar_lea.sflag [#allocation3], 1
    %1533 = vsyncpa %s1532, 1
    %1534 = vsyncpa [#allocation6], 1
    %1535 = vsyncpa [#allocation4], 1
    %s1536 = scalar_lea.sflag [#allocation4], 1
    %1537 = vsyncpa %s1536, 1

</llo_original>
